<compile_context>
chip_gen: v7x
topology: tpu7x:2x2x1
jax: 0.10.0
libtpu: 0.0.40
codegen_flags: <defaults>
</compile_context>

<pallas_src>
import jax
import jax.numpy as jnp
from jax.experimental import pallas as pl
from jax.experimental.pallas import tpu as pltpu

LN_EPS = 1e-5


def _round_up(x, m):
    return ((x + m - 1) // m) * m


def dqn_kernel(x_ref,
               w1_ref, b1_ref, g1_ref, be1_ref,
               w2_ref, b2_ref, g2_ref, be2_ref,
               w3_ref, b3_ref, g3_ref, be3_ref,
               w4_ref, b4_ref,
               o_ref):
    """Fused MLP forward for one batch tile: (linear -> LN -> ReLU) x3 -> linear."""
    # TODO(synk): training-mode dropout via pltpu.prng_random_bits if needed.

    def linear(h_bf16, w_ref, b_ref):
        # bf16 operands on the MXU, f32 accumulation; bias add in f32.
        return jnp.dot(h_bf16, w_ref[...],
                       preferred_element_type=jnp.float32) + b_ref[...]

    def ln_relu(h, g_ref, be_ref):
        # One-pass statistics: sum(h) and sum(h*h) are independent, so the two
        # reductions interleave (and overlap with MXU work) instead of the second
        # pass waiting on mu.  Most of the reduction runs as lane-aligned 128-wide
        # VPU partial sums; only the final 128-lane collapse hits the XLU.
        d = h.shape[-1]
        n_chunks = d // 128
        ps = h[:, 0:128]
        ps2 = ps * ps
        for c in range(1, n_chunks):
            hc = h[:, c * 128:(c + 1) * 128]
            ps = ps + hc
            ps2 = ps2 + hc * hc
        s = jnp.sum(ps, axis=-1, keepdims=True)
        s2 = jnp.sum(ps2, axis=-1, keepdims=True)
        inv_d = 1.0 / d
        mu = s * inv_d
        # Guard against tiny negative variance from f32 cancellation.
        var = jnp.maximum(s2 * inv_d - mu * mu, 0.0)
        # Fold gamma into the normalization scale: one full-width VPU mul saved.
        scale = jax.lax.rsqrt(var + LN_EPS) * g_ref[...]
        y = jnp.maximum((h - mu) * scale + be_ref[...], 0.0)
        # Emit bf16 directly so the next matmul needs no separate cast pass.
        return y.astype(jnp.bfloat16)

    h = ln_relu(linear(x_ref[...], w1_ref, b1_ref), g1_ref, be1_ref)
    # dropout (p=0.2) -> identity in eval mode
    h = ln_relu(linear(h, w2_ref, b2_ref), g2_ref, be2_ref)
    # dropout (p=0.2) -> identity in eval mode
    h = ln_relu(linear(h, w3_ref, b3_ref), g3_ref, be3_ref)
    o_ref[...] = linear(h, w4_ref, b4_ref)


def dqn_forward(x, params, action_size, *, block_b=512):
    B, state_size = x.shape
    n_out = params["w4"].shape[1]          # already padded to a multiple of 128

    # Batch tiling: TB rows per grid step (multiple of 8).  Larger tiles amortize
    # per-step overhead; cap TB so the grid has >= 2 steps whenever the batch
    # allows it, so dimension_semantics=("parallel",) can shard across both
    # TensorCores on v7x.
    B_pad8 = _round_up(B, 8)
    TB = min(block_b, B_pad8)
    if B_pad8 > 8 and B_pad8 // TB < 2:
        TB = _round_up((B_pad8 + 1) // 2, 8)
    B_pad = _round_up(B, TB)

    # Cast the only streamed input to bf16 (halves its DMA) and pad the batch.
    x = x.astype(jnp.bfloat16)
    if B_pad != B:
        x = jnp.pad(x, ((0, B_pad - B), (0, 0)))

    args = (x,
            params["w1"], params["b1"], params["g1"], params["be1"],
            params["w2"], params["b2"], params["g2"], params["be2"],
            params["w3"], params["b3"], params["g3"], params["be3"],
            params["w4"], params["b4"])

    def const_spec(a):
        # Whole-array block, block index pinned at the origin: fetched once,
        # VMEM-resident across all batch grid steps.
        nd = a.ndim
        return pl.BlockSpec(a.shape, lambda i, _nd=nd: (0,) * _nd)

    in_specs = ([pl.BlockSpec((TB, state_size), lambda i: (i, 0))]
                + [const_spec(a) for a in args[1:]])

    out = pl.pallas_call(
        dqn_kernel,
        out_shape=jax.ShapeDtypeStruct((B_pad, n_out), jnp.float32),
        grid=(B_pad // TB,),
        in_specs=in_specs,
        out_specs=pl.BlockSpec((TB, n_out), lambda i: (i, 0)),
        compiler_params=pltpu.CompilerParams(
            dimension_semantics=("parallel",),
            # Keep headroom above the scoped-VMEM default (16 MiB on v5e) so
            # bigger batch tiles remain viable; actual use at TB=1024 is ~10-16 MB.
            vmem_limit_bytes=48 * 1024 * 1024),
    )(*args)
    return out[:B, :action_size]


def orthogonal(key, out_dim, in_dim):
    """Deterministic orthogonal init, like nn.init.orthogonal_ (rows orthonormal when out<=in)."""
    n, m = max(out_dim, in_dim), min(out_dim, in_dim)
    a = jax.random.normal(key, (n, m), dtype=jnp.float32)
    q, r = jnp.linalg.qr(a)
    d = jnp.diagonal(r)
    q = q * jnp.where(d == 0, 1.0, jnp.sign(d))[None, :]
    w = q if out_dim >= in_dim else q.T  # shape (out_dim, in_dim)
    return w.astype(jnp.float32)


def init_params(key, state_size, action_size):
    ks = jax.random.split(key, 4)
    dims = [(512, state_size), (512, 512), (256, 512), (action_size, 256)]
    params = {}
    for i, (k, (dout, din)) in enumerate(zip(ks, dims), start=1):
        w_pt = orthogonal(k, dout, din)                    # PyTorch layout (out, in)
        params[f"w{i}"] = w_pt.T.astype(jnp.bfloat16)      # kernel layout (in, out), bf16
        params[f"b{i}"] = jnp.zeros((1, dout), jnp.float32)
        if i <= 3:
            params[f"g{i}"] = jnp.ones((1, dout), jnp.float32)    # LayerNorm gamma
            params[f"be{i}"] = jnp.zeros((1, dout), jnp.float32)  # LayerNorm beta
    # Lane-dense final layer: pad once here (not per forward call) to a multiple
    # of 128 output columns so the kernel's output store is unmasked.
    n_out = _round_up(max(action_size, 128), 128)
    params["w4"] = jnp.pad(params["w4"], ((0, 0), (0, n_out - action_size)))
    params["b4"] = jnp.pad(params["b4"], ((0, 0), (0, n_out - action_size)))
    return params


def reference_forward(x, p, action_size):
    """Pure-JAX reference with the same precision recipe (bf16 matmuls, f32 accum/LN)."""
    def linear(h, w, b):
        return jnp.dot(h.astype(jnp.bfloat16), w,
                       preferred_element_type=jnp.float32) + b

    def ln_relu(h, g, be):
        mu = jnp.mean(h, axis=-1, keepdims=True)
        var = jnp.mean((h - mu) ** 2, axis=-1, keepdims=True)
        hn = (h - mu) * (jax.lax.rsqrt(var + LN_EPS) * g) + be
        return jnp.maximum(hn, 0.0)

    h = ln_relu(linear(x, p["w1"], p["b1"]), p["g1"], p["be1"])
    h = ln_relu(linear(h, p["w2"], p["b2"]), p["g2"], p["be2"])
    h = ln_relu(linear(h, p["w3"], p["b3"]), p["g3"], p["be3"])
    return linear(h, p["w4"], p["b4"])[:, :action_size]


if __name__ == "__main__":
    key = jax.random.PRNGKey(0)
    k_param, k_x = jax.random.split(key)

    batch = 8
    state_size = 32
    action_size = 8

    params = init_params(k_param, state_size, action_size)
    x = jax.random.normal(k_x, (batch, state_size), dtype=jnp.float32)

    out = jax.block_until_ready(dqn_forward(x, params, action_size))
    ref = reference_forward(x, params, action_size)
    assert out.shape == (batch, action_size)
    assert jnp.allclose(out, ref, atol=1e-2, rtol=1e-2), "mismatch vs JAX reference"

    # Exercise the multi-step batch grid (ragged batch, block_b < B).
    x2 = jax.random.normal(jax.random.PRNGKey(1), (50, state_size), dtype=jnp.float32)
    out2 = jax.block_until_ready(dqn_forward(x2, params, action_size, block_b=16))
    ref2 = reference_forward(x2, params, action_size)
    assert out2.shape == (50, action_size)
    assert jnp.allclose(out2, ref2, atol=1e-2, rtol=1e-2), "mismatch vs JAX reference (grid)"

    # Exercise the "split into >= 2 grid steps" path (B > 8, block_b >= B_pad).
    x3 = jax.random.normal(jax.random.PRNGKey(2), (40, state_size), dtype=jnp.float32)
    out3 = jax.block_until_ready(dqn_forward(x3, params, action_size))
    ref3 = reference_forward(x3, params, action_size)
    assert out3.shape == (40, action_size)
    assert jnp.allclose(out3, ref3, atol=1e-2, rtol=1e-2), "mismatch vs JAX reference (split)"

    print("KERNEL_OK")
</pallas_src>

<mosaic_0001>
module attributes {stable_mosaic.version = 11 : i64} {
  func.func @dqn_kernel(%arg0: i32, %arg1: memref<8x32xbf16, #tpu.memory_space<vmem>>, %arg2: memref<32x512xbf16, #tpu.memory_space<vmem>>, %arg3: memref<1x512xf32, #tpu.memory_space<vmem>>, %arg4: memref<1x512xf32, #tpu.memory_space<vmem>>, %arg5: memref<1x512xf32, #tpu.memory_space<vmem>>, %arg6: memref<512x512xbf16, #tpu.memory_space<vmem>>, %arg7: memref<1x512xf32, #tpu.memory_space<vmem>>, %arg8: memref<1x512xf32, #tpu.memory_space<vmem>>, %arg9: memref<1x512xf32, #tpu.memory_space<vmem>>, %arg10: memref<512x256xbf16, #tpu.memory_space<vmem>>, %arg11: memref<1x256xf32, #tpu.memory_space<vmem>>, %arg12: memref<1x256xf32, #tpu.memory_space<vmem>>, %arg13: memref<1x256xf32, #tpu.memory_space<vmem>>, %arg14: memref<256x128xbf16, #tpu.memory_space<vmem>>, %arg15: memref<1x128xf32, #tpu.memory_space<vmem>>, %arg16: memref<8x128xf32, #tpu.memory_space<vmem>>) attributes {dimension_semantics = [#tpu.dimension_semantics<parallel>], iteration_bounds = array<i64: 1>, scalar_prefetch = 0 : i64, scratch_operands = 0 : i64, tpu.core_type = #tpu.core_type<tc>, window_params = [{transform_indices = @transform_0, window_bounds = array<i64: 8, 32>}, {pipeline_mode = #tpu.pipeline_mode<synchronous>, transform_indices = @transform_1, window_bounds = array<i64: 32, 512>}, {pipeline_mode = #tpu.pipeline_mode<synchronous>, transform_indices = @transform_2, window_bounds = array<i64: 1, 512>}, {pipeline_mode = #tpu.pipeline_mode<synchronous>, transform_indices = @transform_3, window_bounds = array<i64: 1, 512>}, {pipeline_mode = #tpu.pipeline_mode<synchronous>, transform_indices = @transform_4, window_bounds = array<i64: 1, 512>}, {pipeline_mode = #tpu.pipeline_mode<synchronous>, transform_indices = @transform_5, window_bounds = array<i64: 512, 512>}, {pipeline_mode = #tpu.pipeline_mode<synchronous>, transform_indices = @transform_6, window_bounds = array<i64: 1, 512>}, {pipeline_mode = #tpu.pipeline_mode<synchronous>, transform_indices = @transform_7, window_bounds = array<i64: 1, 512>}, {pipeline_mode = #tpu.pipeline_mode<synchronous>, transform_indices = @transform_8, window_bounds = array<i64: 1, 512>}, {pipeline_mode = #tpu.pipeline_mode<synchronous>, transform_indices = @transform_9, window_bounds = array<i64: 512, 256>}, {pipeline_mode = #tpu.pipeline_mode<synchronous>, transform_indices = @transform_10, window_bounds = array<i64: 1, 256>}, {pipeline_mode = #tpu.pipeline_mode<synchronous>, transform_indices = @transform_11, window_bounds = array<i64: 1, 256>}, {pipeline_mode = #tpu.pipeline_mode<synchronous>, transform_indices = @transform_12, window_bounds = array<i64: 1, 256>}, {pipeline_mode = #tpu.pipeline_mode<synchronous>, transform_indices = @transform_13, window_bounds = array<i64: 256, 128>}, {pipeline_mode = #tpu.pipeline_mode<synchronous>, transform_indices = @transform_14, window_bounds = array<i64: 1, 128>}, {transform_indices = @transform_15, window_bounds = array<i64: 8, 128>}]} {
    %c0 = arith.constant 0 : index
    %c0_0 = arith.constant 0 : index
    %0 = vector.load %arg1[%c0, %c0_0] : memref<8x32xbf16, #tpu.memory_space<vmem>>, vector<8x32xbf16>
    %c0_1 = arith.constant 0 : index
    %c0_2 = arith.constant 0 : index
    %1 = vector.load %arg2[%c0_1, %c0_2] : memref<32x512xbf16, #tpu.memory_space<vmem>>, vector<32x512xbf16>
    %cst = arith.constant dense<0.000000e+00> : vector<8x512xf32>
    %2 = tpu.matmul %0, %1, %cst {dimension_numbers = #tpu.dot_dimension_numbers<[1], [0], [0], [1], [0, 0, 1, 1], [], []>} : vector<8x32xbf16>, vector<32x512xbf16>, vector<8x512xf32> -> vector<8x512xf32>
    %c0_3 = arith.constant 0 : index
    %c0_4 = arith.constant 0 : index
    %3 = vector.load %arg3[%c0_3, %c0_4] : memref<1x512xf32, #tpu.memory_space<vmem>>, vector<1x512xf32>
    %4 = vector.broadcast %3 : vector<1x512xf32> to vector<8x512xf32>
    %5 = arith.addf %2, %4 : vector<8x512xf32>
    %6 = vector.extract_strided_slice %5 {offsets = [0, 0], sizes = [8, 128], strides = [1, 1]} : vector<8x512xf32> to vector<8x128xf32>
    %7 = arith.mulf %6, %6 : vector<8x128xf32>
    %8 = vector.extract_strided_slice %5 {offsets = [0, 128], sizes = [8, 128], strides = [1, 1]} : vector<8x512xf32> to vector<8x128xf32>
    %9 = arith.addf %6, %8 : vector<8x128xf32>
    %10 = arith.mulf %8, %8 : vector<8x128xf32>
    %11 = arith.addf %7, %10 : vector<8x128xf32>
    %12 = vector.extract_strided_slice %5 {offsets = [0, 256], sizes = [8, 128], strides = [1, 1]} : vector<8x512xf32> to vector<8x128xf32>
    %13 = arith.addf %9, %12 : vector<8x128xf32>
    %14 = arith.mulf %12, %12 : vector<8x128xf32>
    %15 = arith.addf %11, %14 : vector<8x128xf32>
    %16 = vector.extract_strided_slice %5 {offsets = [0, 384], sizes = [8, 128], strides = [1, 1]} : vector<8x512xf32> to vector<8x128xf32>
    %17 = arith.addf %13, %16 : vector<8x128xf32>
    %18 = arith.mulf %16, %16 : vector<8x128xf32>
    %19 = arith.addf %15, %18 : vector<8x128xf32>
    %cst_5 = arith.constant dense<0.000000e+00> : vector<8xf32>
    %20 = vector.multi_reduction <add>, %17, %cst_5 [1] : vector<8x128xf32> to vector<8xf32>
    %21 = vector.shape_cast %20 : vector<8xf32> to vector<8x1xf32>
    %cst_6 = arith.constant dense<0.000000e+00> : vector<8xf32>
    %22 = vector.multi_reduction <add>, %19, %cst_6 [1] : vector<8x128xf32> to vector<8xf32>
    %23 = vector.shape_cast %22 : vector<8xf32> to vector<8x1xf32>
    %cst_7 = arith.constant 0.001953125 : f32
    %24 = vector.broadcast %cst_7 : f32 to vector<8x1xf32>
    %25 = arith.mulf %21, %24 : vector<8x1xf32>
    %cst_8 = arith.constant 0.001953125 : f32
    %26 = vector.broadcast %cst_8 : f32 to vector<8x1xf32>
    %27 = arith.mulf %23, %26 : vector<8x1xf32>
    %28 = arith.mulf %25, %25 : vector<8x1xf32>
    %29 = arith.subf %27, %28 : vector<8x1xf32>
    %cst_9 = arith.constant 0.000000e+00 : f32
    %30 = vector.broadcast %cst_9 : f32 to vector<8x1xf32>
    %31 = arith.maximumf %29, %30 : vector<8x1xf32>
    %cst_10 = arith.constant 9.99999974E-6 : f32
    %32 = vector.broadcast %cst_10 : f32 to vector<8x1xf32>
    %33 = arith.addf %31, %32 : vector<8x1xf32>
    %34 = math.rsqrt %33 : vector<8x1xf32>
    %c0_11 = arith.constant 0 : index
    %c0_12 = arith.constant 0 : index
    %35 = vector.load %arg4[%c0_11, %c0_12] : memref<1x512xf32, #tpu.memory_space<vmem>>, vector<1x512xf32>
    %36 = vector.broadcast %34 : vector<8x1xf32> to vector<8x512xf32>
    %37 = vector.broadcast %35 : vector<1x512xf32> to vector<8x512xf32>
    %38 = arith.mulf %36, %37 : vector<8x512xf32>
    %39 = vector.broadcast %25 : vector<8x1xf32> to vector<8x512xf32>
    %40 = arith.subf %5, %39 : vector<8x512xf32>
    %41 = arith.mulf %40, %38 : vector<8x512xf32>
    %c0_13 = arith.constant 0 : index
    %c0_14 = arith.constant 0 : index
    %42 = vector.load %arg5[%c0_13, %c0_14] : memref<1x512xf32, #tpu.memory_space<vmem>>, vector<1x512xf32>
    %43 = vector.broadcast %42 : vector<1x512xf32> to vector<8x512xf32>
    %44 = arith.addf %41, %43 : vector<8x512xf32>
    %cst_15 = arith.constant 0.000000e+00 : f32
    %45 = vector.broadcast %cst_15 : f32 to vector<8x512xf32>
    %46 = arith.maximumf %44, %45 : vector<8x512xf32>
    %47 = arith.truncf %46 : vector<8x512xf32> to vector<8x512xbf16>
    %c0_16 = arith.constant 0 : index
    %c0_17 = arith.constant 0 : index
    %48 = vector.load %arg6[%c0_16, %c0_17] : memref<512x512xbf16, #tpu.memory_space<vmem>>, vector<512x512xbf16>
    %cst_18 = arith.constant dense<0.000000e+00> : vector<8x512xf32>
    %49 = tpu.matmul %47, %48, %cst_18 {dimension_numbers = #tpu.dot_dimension_numbers<[1], [0], [0], [1], [0, 0, 1, 1], [], []>} : vector<8x512xbf16>, vector<512x512xbf16>, vector<8x512xf32> -> vector<8x512xf32>
    %c0_19 = arith.constant 0 : index
    %c0_20 = arith.constant 0 : index
    %50 = vector.load %arg7[%c0_19, %c0_20] : memref<1x512xf32, #tpu.memory_space<vmem>>, vector<1x512xf32>
    %51 = vector.broadcast %50 : vector<1x512xf32> to vector<8x512xf32>
    %52 = arith.addf %49, %51 : vector<8x512xf32>
    %53 = vector.extract_strided_slice %52 {offsets = [0, 0], sizes = [8, 128], strides = [1, 1]} : vector<8x512xf32> to vector<8x128xf32>
    %54 = arith.mulf %53, %53 : vector<8x128xf32>
    %55 = vector.extract_strided_slice %52 {offsets = [0, 128], sizes = [8, 128], strides = [1, 1]} : vector<8x512xf32> to vector<8x128xf32>
    %56 = arith.addf %53, %55 : vector<8x128xf32>
    %57 = arith.mulf %55, %55 : vector<8x128xf32>
    %58 = arith.addf %54, %57 : vector<8x128xf32>
    %59 = vector.extract_strided_slice %52 {offsets = [0, 256], sizes = [8, 128], strides = [1, 1]} : vector<8x512xf32> to vector<8x128xf32>
    %60 = arith.addf %56, %59 : vector<8x128xf32>
    %61 = arith.mulf %59, %59 : vector<8x128xf32>
    %62 = arith.addf %58, %61 : vector<8x128xf32>
    %63 = vector.extract_strided_slice %52 {offsets = [0, 384], sizes = [8, 128], strides = [1, 1]} : vector<8x512xf32> to vector<8x128xf32>
    %64 = arith.addf %60, %63 : vector<8x128xf32>
    %65 = arith.mulf %63, %63 : vector<8x128xf32>
    %66 = arith.addf %62, %65 : vector<8x128xf32>
    %cst_21 = arith.constant dense<0.000000e+00> : vector<8xf32>
    %67 = vector.multi_reduction <add>, %64, %cst_21 [1] : vector<8x128xf32> to vector<8xf32>
    %68 = vector.shape_cast %67 : vector<8xf32> to vector<8x1xf32>
    %cst_22 = arith.constant dense<0.000000e+00> : vector<8xf32>
    %69 = vector.multi_reduction <add>, %66, %cst_22 [1] : vector<8x128xf32> to vector<8xf32>
    %70 = vector.shape_cast %69 : vector<8xf32> to vector<8x1xf32>
    %cst_23 = arith.constant 0.001953125 : f32
    %71 = vector.broadcast %cst_23 : f32 to vector<8x1xf32>
    %72 = arith.mulf %68, %71 : vector<8x1xf32>
    %cst_24 = arith.constant 0.001953125 : f32
    %73 = vector.broadcast %cst_24 : f32 to vector<8x1xf32>
    %74 = arith.mulf %70, %73 : vector<8x1xf32>
    %75 = arith.mulf %72, %72 : vector<8x1xf32>
    %76 = arith.subf %74, %75 : vector<8x1xf32>
    %cst_25 = arith.constant 0.000000e+00 : f32
    %77 = vector.broadcast %cst_25 : f32 to vector<8x1xf32>
    %78 = arith.maximumf %76, %77 : vector<8x1xf32>
    %cst_26 = arith.constant 9.99999974E-6 : f32
    %79 = vector.broadcast %cst_26 : f32 to vector<8x1xf32>
    %80 = arith.addf %78, %79 : vector<8x1xf32>
    %81 = math.rsqrt %80 : vector<8x1xf32>
    %c0_27 = arith.constant 0 : index
    %c0_28 = arith.constant 0 : index
    %82 = vector.load %arg8[%c0_27, %c0_28] : memref<1x512xf32, #tpu.memory_space<vmem>>, vector<1x512xf32>
    %83 = vector.broadcast %81 : vector<8x1xf32> to vector<8x512xf32>
    %84 = vector.broadcast %82 : vector<1x512xf32> to vector<8x512xf32>
    %85 = arith.mulf %83, %84 : vector<8x512xf32>
    %86 = vector.broadcast %72 : vector<8x1xf32> to vector<8x512xf32>
    %87 = arith.subf %52, %86 : vector<8x512xf32>
    %88 = arith.mulf %87, %85 : vector<8x512xf32>
    %c0_29 = arith.constant 0 : index
    %c0_30 = arith.constant 0 : index
    %89 = vector.load %arg9[%c0_29, %c0_30] : memref<1x512xf32, #tpu.memory_space<vmem>>, vector<1x512xf32>
    %90 = vector.broadcast %89 : vector<1x512xf32> to vector<8x512xf32>
    %91 = arith.addf %88, %90 : vector<8x512xf32>
    %cst_31 = arith.constant 0.000000e+00 : f32
    %92 = vector.broadcast %cst_31 : f32 to vector<8x512xf32>
    %93 = arith.maximumf %91, %92 : vector<8x512xf32>
    %94 = arith.truncf %93 : vector<8x512xf32> to vector<8x512xbf16>
    %c0_32 = arith.constant 0 : index
    %c0_33 = arith.constant 0 : index
    %95 = vector.load %arg10[%c0_32, %c0_33] : memref<512x256xbf16, #tpu.memory_space<vmem>>, vector<512x256xbf16>
    %cst_34 = arith.constant dense<0.000000e+00> : vector<8x256xf32>
    %96 = tpu.matmul %94, %95, %cst_34 {dimension_numbers = #tpu.dot_dimension_numbers<[1], [0], [0], [1], [0, 0, 1, 1], [], []>} : vector<8x512xbf16>, vector<512x256xbf16>, vector<8x256xf32> -> vector<8x256xf32>
    %c0_35 = arith.constant 0 : index
    %c0_36 = arith.constant 0 : index
    %97 = vector.load %arg11[%c0_35, %c0_36] : memref<1x256xf32, #tpu.memory_space<vmem>>, vector<1x256xf32>
    %98 = vector.broadcast %97 : vector<1x256xf32> to vector<8x256xf32>
    %99 = arith.addf %96, %98 : vector<8x256xf32>
    %100 = vector.extract_strided_slice %99 {offsets = [0, 0], sizes = [8, 128], strides = [1, 1]} : vector<8x256xf32> to vector<8x128xf32>
    %101 = arith.mulf %100, %100 : vector<8x128xf32>
    %102 = vector.extract_strided_slice %99 {offsets = [0, 128], sizes = [8, 128], strides = [1, 1]} : vector<8x256xf32> to vector<8x128xf32>
    %103 = arith.addf %100, %102 : vector<8x128xf32>
    %104 = arith.mulf %102, %102 : vector<8x128xf32>
    %105 = arith.addf %101, %104 : vector<8x128xf32>
    %cst_37 = arith.constant dense<0.000000e+00> : vector<8xf32>
    %106 = vector.multi_reduction <add>, %103, %cst_37 [1] : vector<8x128xf32> to vector<8xf32>
    %107 = vector.shape_cast %106 : vector<8xf32> to vector<8x1xf32>
    %cst_38 = arith.constant dense<0.000000e+00> : vector<8xf32>
    %108 = vector.multi_reduction <add>, %105, %cst_38 [1] : vector<8x128xf32> to vector<8xf32>
    %109 = vector.shape_cast %108 : vector<8xf32> to vector<8x1xf32>
    %cst_39 = arith.constant 3.906250e-03 : f32
    %110 = vector.broadcast %cst_39 : f32 to vector<8x1xf32>
    %111 = arith.mulf %107, %110 : vector<8x1xf32>
    %cst_40 = arith.constant 3.906250e-03 : f32
    %112 = vector.broadcast %cst_40 : f32 to vector<8x1xf32>
    %113 = arith.mulf %109, %112 : vector<8x1xf32>
    %114 = arith.mulf %111, %111 : vector<8x1xf32>
    %115 = arith.subf %113, %114 : vector<8x1xf32>
    %cst_41 = arith.constant 0.000000e+00 : f32
    %116 = vector.broadcast %cst_41 : f32 to vector<8x1xf32>
    %117 = arith.maximumf %115, %116 : vector<8x1xf32>
    %cst_42 = arith.constant 9.99999974E-6 : f32
    %118 = vector.broadcast %cst_42 : f32 to vector<8x1xf32>
    %119 = arith.addf %117, %118 : vector<8x1xf32>
    %120 = math.rsqrt %119 : vector<8x1xf32>
    %c0_43 = arith.constant 0 : index
    %c0_44 = arith.constant 0 : index
    %121 = vector.load %arg12[%c0_43, %c0_44] : memref<1x256xf32, #tpu.memory_space<vmem>>, vector<1x256xf32>
    %122 = vector.broadcast %120 : vector<8x1xf32> to vector<8x256xf32>
    %123 = vector.broadcast %121 : vector<1x256xf32> to vector<8x256xf32>
    %124 = arith.mulf %122, %123 : vector<8x256xf32>
    %125 = vector.broadcast %111 : vector<8x1xf32> to vector<8x256xf32>
    %126 = arith.subf %99, %125 : vector<8x256xf32>
    %127 = arith.mulf %126, %124 : vector<8x256xf32>
    %c0_45 = arith.constant 0 : index
    %c0_46 = arith.constant 0 : index
    %128 = vector.load %arg13[%c0_45, %c0_46] : memref<1x256xf32, #tpu.memory_space<vmem>>, vector<1x256xf32>
    %129 = vector.broadcast %128 : vector<1x256xf32> to vector<8x256xf32>
    %130 = arith.addf %127, %129 : vector<8x256xf32>
    %cst_47 = arith.constant 0.000000e+00 : f32
    %131 = vector.broadcast %cst_47 : f32 to vector<8x256xf32>
    %132 = arith.maximumf %130, %131 : vector<8x256xf32>
    %133 = arith.truncf %132 : vector<8x256xf32> to vector<8x256xbf16>
    %c0_48 = arith.constant 0 : index
    %c0_49 = arith.constant 0 : index
    %134 = vector.load %arg14[%c0_48, %c0_49] : memref<256x128xbf16, #tpu.memory_space<vmem>>, vector<256x128xbf16>
    %cst_50 = arith.constant dense<0.000000e+00> : vector<8x128xf32>
    %135 = tpu.matmul %133, %134, %cst_50 {dimension_numbers = #tpu.dot_dimension_numbers<[1], [0], [0], [1], [0, 0, 1, 1], [], []>} : vector<8x256xbf16>, vector<256x128xbf16>, vector<8x128xf32> -> vector<8x128xf32>
    %c0_51 = arith.constant 0 : index
    %c0_52 = arith.constant 0 : index
    %136 = vector.load %arg15[%c0_51, %c0_52] : memref<1x128xf32, #tpu.memory_space<vmem>>, vector<1x128xf32>
    %137 = vector.broadcast %136 : vector<1x128xf32> to vector<8x128xf32>
    %138 = arith.addf %135, %137 : vector<8x128xf32>
    %c0_53 = arith.constant 0 : index
    %c0_54 = arith.constant 0 : index
    %139 = vector.load %arg16[%c0_53, %c0_54] : memref<8x128xf32, #tpu.memory_space<vmem>>, vector<8x128xf32>
    tpu.vector_store %arg16[%c0_53, %c0_54], %138 {strides = array<i32>} : memref<8x128xf32, #tpu.memory_space<vmem>>, vector<8x128xf32>,
    return
  }
  func.func @transform_0(%arg0: i32) -> (i32, i32) {
    %c0_i32 = arith.constant 0 : i32
    %c0_i32_0 = arith.constant 0 : i32
    return %arg0, %c0_i32 : i32, i32
  }
  func.func @transform_1(%arg0: i32) -> (i32, i32) {
    %c0_i32 = arith.constant 0 : i32
    %c0_i32_0 = arith.constant 0 : i32
    %c0_i32_1 = arith.constant 0 : i32
    return %c0_i32, %c0_i32_0 : i32, i32
  }
  func.func @transform_2(%arg0: i32) -> (i32, i32) {
    %c0_i32 = arith.constant 0 : i32
    %c0_i32_0 = arith.constant 0 : i32
    %c0_i32_1 = arith.constant 0 : i32
    return %c0_i32, %c0_i32_0 : i32, i32
  }
  func.func @transform_3(%arg0: i32) -> (i32, i32) {
    %c0_i32 = arith.constant 0 : i32
    %c0_i32_0 = arith.constant 0 : i32
    %c0_i32_1 = arith.constant 0 : i32
    return %c0_i32, %c0_i32_0 : i32, i32
  }
  func.func @transform_4(%arg0: i32) -> (i32, i32) {
    %c0_i32 = arith.constant 0 : i32
    %c0_i32_0 = arith.constant 0 : i32
    %c0_i32_1 = arith.constant 0 : i32
    return %c0_i32, %c0_i32_0 : i32, i32
  }
  func.func @transform_5(%arg0: i32) -> (i32, i32) {
    %c0_i32 = arith.constant 0 : i32
    %c0_i32_0 = arith.constant 0 : i32
    %c0_i32_1 = arith.constant 0 : i32
    return %c0_i32, %c0_i32_0 : i32, i32
  }
  func.func @transform_6(%arg0: i32) -> (i32, i32) {
    %c0_i32 = arith.constant 0 : i32
    %c0_i32_0 = arith.constant 0 : i32
    %c0_i32_1 = arith.constant 0 : i32
    return %c0_i32, %c0_i32_0 : i32, i32
  }
  func.func @transform_7(%arg0: i32) -> (i32, i32) {
    %c0_i32 = arith.constant 0 : i32
    %c0_i32_0 = arith.constant 0 : i32
    %c0_i32_1 = arith.constant 0 : i32
    return %c0_i32, %c0_i32_0 : i32, i32
  }
  func.func @transform_8(%arg0: i32) -> (i32, i32) {
    %c0_i32 = arith.constant 0 : i32
    %c0_i32_0 = arith.constant 0 : i32
    %c0_i32_1 = arith.constant 0 : i32
    return %c0_i32, %c0_i32_0 : i32, i32
  }
  func.func @transform_9(%arg0: i32) -> (i32, i32) {
    %c0_i32 = arith.constant 0 : i32
    %c0_i32_0 = arith.constant 0 : i32
    %c0_i32_1 = arith.constant 0 : i32
    return %c0_i32, %c0_i32_0 : i32, i32
  }
  func.func @transform_10(%arg0: i32) -> (i32, i32) {
    %c0_i32 = arith.constant 0 : i32
    %c0_i32_0 = arith.constant 0 : i32
    %c0_i32_1 = arith.constant 0 : i32
    return %c0_i32, %c0_i32_0 : i32, i32
  }
  func.func @transform_11(%arg0: i32) -> (i32, i32) {
    %c0_i32 = arith.constant 0 : i32
    %c0_i32_0 = arith.constant 0 : i32
    %c0_i32_1 = arith.constant 0 : i32
    return %c0_i32, %c0_i32_0 : i32, i32
  }
  func.func @transform_12(%arg0: i32) -> (i32, i32) {
    %c0_i32 = arith.constant 0 : i32
    %c0_i32_0 = arith.constant 0 : i32
    %c0_i32_1 = arith.constant 0 : i32
    return %c0_i32, %c0_i32_0 : i32, i32
  }
  func.func @transform_13(%arg0: i32) -> (i32, i32) {
    %c0_i32 = arith.constant 0 : i32
    %c0_i32_0 = arith.constant 0 : i32
    %c0_i32_1 = arith.constant 0 : i32
    return %c0_i32, %c0_i32_0 : i32, i32
  }
  func.func @transform_14(%arg0: i32) -> (i32, i32) {
    %c0_i32 = arith.constant 0 : i32
    %c0_i32_0 = arith.constant 0 : i32
    %c0_i32_1 = arith.constant 0 : i32
    return %c0_i32, %c0_i32_0 : i32, i32
  }
  func.func @transform_15(%arg0: i32) -> (i32, i32) {
    %c0_i32 = arith.constant 0 : i32
    %c0_i32_0 = arith.constant 0 : i32
    return %arg0, %c0_i32 : i32, i32
  }
}

</mosaic_0001>

<llo_original>
// kernel: tpu_custom_call.1
$region0: #{tpu_custom_call.1}
  #allocation0 [shape = 'u32[]', space=smem, size = 0x4, offset = 0x4, fixed_abs, tag = 'smem constant byte address 0x4 - core index']
  #allocation1 [shape = 'u32[144,128]{1,0:T(1,128)}', space=vmem, size = 0x12000, scoped, tag = 'internal scratch']
  %s0 = inlined_call_operand.hbm [shape: bf16[8,32], index: 0, kind: input, shape index: {}]
  %s1 = inlined_call_operand.hbm [shape: bf16[32,512], index: 1, kind: input, shape index: {}]
  %s2 = inlined_call_operand.vmem [shape: f32[1,512], index: 2, kind: input, shape index: {}]
  %s3 = inlined_call_operand.vmem [shape: f32[1,512], index: 3, kind: input, shape index: {}]
  %s4 = inlined_call_operand.vmem [shape: f32[1,512], index: 4, kind: input, shape index: {}]
  %s5 = inlined_call_operand.hbm [shape: bf16[512,512], index: 5, kind: input, shape index: {}]
  %s6 = inlined_call_operand.vmem [shape: f32[1,512], index: 6, kind: input, shape index: {}]
  %s7 = inlined_call_operand.vmem [shape: f32[1,512], index: 7, kind: input, shape index: {}]
  %s8 = inlined_call_operand.vmem [shape: f32[1,512], index: 8, kind: input, shape index: {}]
  %s9 = inlined_call_operand.hbm [shape: bf16[512,256], index: 9, kind: input, shape index: {}]
  %s10 = inlined_call_operand.vmem [shape: f32[1,256], index: 10, kind: input, shape index: {}]
  %s11 = inlined_call_operand.vmem [shape: f32[1,256], index: 11, kind: input, shape index: {}]
  %s12 = inlined_call_operand.vmem [shape: f32[1,256], index: 12, kind: input, shape index: {}]
  %s13 = inlined_call_operand.hbm [shape: bf16[256,128], index: 13, kind: input, shape index: {}]
  %s14 = inlined_call_operand.vmem [shape: f32[1,128], index: 14, kind: input, shape index: {}]
  %s15 = inlined_call_operand.hbm [shape: f32[8,128], index: 15, kind: output, shape index: {}]
  %s16 = sld [smem:[#allocation0]]
  $region90: #{tpu_custom_call.1} parent=0
    _
  %s18 = ssub.s32 1, %s16
  %s19 = scalar_select 0, %s18, %s16
  $region1: #{tpu_custom_call.1} parent=0
    #allocation2 [shape = 'u8[2048]{0}', space=vmem, size = 0x800, scoped, tag = 'input window, operand 0, single buffered']
    #allocation3 [shape = 's32[1]{0}', space=sflag, size = 0x4, scoped, tag = 'scoped memory for tpu_custom_call.1']
    #allocation4 [shape = 's32[1]{0}', space=sflag, size = 0x4, scoped, tag = 'scoped memory for tpu_custom_call.1']
    #allocation5 [shape = 'u8[32768]{0}', space=vmem, size = 0x8000, scoped, tag = 'input window, operand 1, single buffered']
    #allocation6 [shape = 's32[1]{0}', space=sflag, size = 0x4, scoped, tag = 'scoped memory for tpu_custom_call.1']
    #allocation7 [shape = 'u8[524288]{0}', space=vmem, size = 0x80000, scoped, tag = 'input window, operand 5, single buffered']
    #allocation8 [shape = 'u8[262144]{0}', space=vmem, size = 0x40000, scoped, tag = 'input window, operand 9, single buffered']
    #allocation9 [shape = 's32[1]{0}', space=sflag, size = 0x4, scoped, tag = 'scoped memory for tpu_custom_call.1']
    #allocation10 [shape = 'u8[65536]{0}', space=vmem, size = 0x10000, scoped, tag = 'input window, operand 13, single buffered']
    #allocation11 [shape = 'u8[4096]{0}', space=vmem, size = 0x1000, scoped, tag = 'output window, operand 0, single buffered']
    %20 = vsyncpa [#allocation3], 0
    %21 = vsyncpa [#allocation6], 0
    %22 = vsyncpa [#allocation9], 0
    %23 = vsyncpa [#allocation4], 0
    // Predicated region
    $region2: #{tpu_custom_call.1} parent=1 // pred_check
      _
    $region3: #{tpu_custom_call.1} parent=1 // pred_check_branch
      %25 = sbr.rel (0) target = $region5
    $region4: #{tpu_custom_call.1} parent=1 // pred_region
      %s27 = ssub.s32 64, 64
      %28 = vsyncadd [#allocation3], %s27
      %s30 = sshll.u32 [#allocation2], 4
      %s31 = int_to_ptr.vmem [resolvable:$true] %s30
      %33 = dma.hbm_to_vmem [thread:$0]  %s0, 64, %s31, [#allocation3]
    $region5: #{tpu_custom_call.1} parent=1 // pred_fallthru
      _
    // Predicated region
    $region6: #{tpu_custom_call.1} parent=1 // pred_check
      _
    $region7: #{tpu_custom_call.1} parent=1 // pred_check_branch
      %35 = sbr.rel (0) target = $region9
    $region8: #{tpu_custom_call.1} parent=1 // pred_region
      %s37 = ssub.s32 1024, 1024
      %38 = vsyncadd [#allocation6], %s37
      %s39 = sshll.u32 [#allocation5], 4
      %s40 = int_to_ptr.vmem [resolvable:$true] %s39
      %45 = dma.hbm_to_vmem [thread:$0]  %s1, 1024, %s40, [#allocation6], 256, 256, 16
    $region9: #{tpu_custom_call.1} parent=1 // pred_fallthru
      _
    // Predicated region
    $region10: #{tpu_custom_call.1} parent=1 // pred_check
      _
    $region11: #{tpu_custom_call.1} parent=1 // pred_check_branch
      %47 = sbr.rel (0) target = $region13
    $region12: #{tpu_custom_call.1} parent=1 // pred_region
      _
    $region13: #{tpu_custom_call.1} parent=1 // pred_fallthru
      _
    // Predicated region
    $region14: #{tpu_custom_call.1} parent=1 // pred_check
      _
    $region15: #{tpu_custom_call.1} parent=1 // pred_check_branch
      %49 = sbr.rel (0) target = $region17
    $region16: #{tpu_custom_call.1} parent=1 // pred_region
      _
    $region17: #{tpu_custom_call.1} parent=1 // pred_fallthru
      _
    // Predicated region
    $region18: #{tpu_custom_call.1} parent=1 // pred_check
      _
    $region19: #{tpu_custom_call.1} parent=1 // pred_check_branch
      %51 = sbr.rel (0) target = $region21
    $region20: #{tpu_custom_call.1} parent=1 // pred_region
      _
    $region21: #{tpu_custom_call.1} parent=1 // pred_fallthru
      _
    // Predicated region
    $region22: #{tpu_custom_call.1} parent=1 // pred_check
      _
    $region23: #{tpu_custom_call.1} parent=1 // pred_check_branch
      %53 = sbr.rel (0) target = $region25
    $region24: #{tpu_custom_call.1} parent=1 // pred_region
      %s55 = ssub.s32 16384, 16384
      %56 = vsyncadd [#allocation6], %s55
      %s57 = sshll.u32 [#allocation7], 4
      %s58 = int_to_ptr.vmem [resolvable:$true] %s57
      %63 = dma.hbm_to_vmem [thread:$0]  %s5, 16384, %s58, [#allocation6], 256, 256, 16
    $region25: #{tpu_custom_call.1} parent=1 // pred_fallthru
      _
    // Predicated region
    $region26: #{tpu_custom_call.1} parent=1 // pred_check
      _
    $region27: #{tpu_custom_call.1} parent=1 // pred_check_branch
      %65 = sbr.rel (0) target = $region29
    $region28: #{tpu_custom_call.1} parent=1 // pred_region
      _
    $region29: #{tpu_custom_call.1} parent=1 // pred_fallthru
      _
    // Predicated region
    $region30: #{tpu_custom_call.1} parent=1 // pred_check
      _
    $region31: #{tpu_custom_call.1} parent=1 // pred_check_branch
      %67 = sbr.rel (0) target = $region33
    $region32: #{tpu_custom_call.1} parent=1 // pred_region
      _
    $region33: #{tpu_custom_call.1} parent=1 // pred_fallthru
      _
    // Predicated region
    $region34: #{tpu_custom_call.1} parent=1 // pred_check
      _
    $region35: #{tpu_custom_call.1} parent=1 // pred_check_branch
      %69 = sbr.rel (0) target = $region37
    $region36: #{tpu_custom_call.1} parent=1 // pred_region
      _
    $region37: #{tpu_custom_call.1} parent=1 // pred_fallthru
      _
    // Predicated region
    $region38: #{tpu_custom_call.1} parent=1 // pred_check
      _
    $region39: #{tpu_custom_call.1} parent=1 // pred_check_branch
      %71 = sbr.rel (0) target = $region41
    $region40: #{tpu_custom_call.1} parent=1 // pred_region
      %s73 = ssub.s32 8192, 8192
      %74 = vsyncadd [#allocation9], %s73
      %s75 = sshll.u32 [#allocation8], 4
      %s76 = int_to_ptr.vmem [resolvable:$true] %s75
      %81 = dma.hbm_to_vmem [thread:$0]  %s9, 8192, %s76, [#allocation9], 128, 128, 8
    $region41: #{tpu_custom_call.1} parent=1 // pred_fallthru
      _
    // Predicated region
    $region42: #{tpu_custom_call.1} parent=1 // pred_check
      _
    $region43: #{tpu_custom_call.1} parent=1 // pred_check_branch
      %83 = sbr.rel (0) target = $region45
    $region44: #{tpu_custom_call.1} parent=1 // pred_region
      _
    $region45: #{tpu_custom_call.1} parent=1 // pred_fallthru
      _
    // Predicated region
    $region46: #{tpu_custom_call.1} parent=1 // pred_check
      _
    $region47: #{tpu_custom_call.1} parent=1 // pred_check_branch
      %85 = sbr.rel (0) target = $region49
    $region48: #{tpu_custom_call.1} parent=1 // pred_region
      _
    $region49: #{tpu_custom_call.1} parent=1 // pred_fallthru
      _
    // Predicated region
    $region50: #{tpu_custom_call.1} parent=1 // pred_check
      _
    $region51: #{tpu_custom_call.1} parent=1 // pred_check_branch
      %87 = sbr.rel (0) target = $region53
    $region52: #{tpu_custom_call.1} parent=1 // pred_region
      _
    $region53: #{tpu_custom_call.1} parent=1 // pred_fallthru
      _
    // Predicated region
    $region54: #{tpu_custom_call.1} parent=1 // pred_check
      _
    $region55: #{tpu_custom_call.1} parent=1 // pred_check_branch
      %89 = sbr.rel (0) target = $region57
    $region56: #{tpu_custom_call.1} parent=1 // pred_region
      %s91 = ssub.s32 2048, 2048
      %92 = vsyncadd [#allocation9], %s91
      %s93 = sshll.u32 [#allocation10], 4
      %s94 = int_to_ptr.vmem [resolvable:$true] %s93
      %99 = dma.hbm_to_vmem [thread:$0]  %s13, 2048, %s94, [#allocation9], 64, 64, 4
    $region57: #{tpu_custom_call.1} parent=1 // pred_fallthru
      _
    // Predicated region
    $region58: #{tpu_custom_call.1} parent=1 // pred_check
      _
    $region59: #{tpu_custom_call.1} parent=1 // pred_check_branch
      %101 = sbr.rel (0) target = $region61
    $region60: #{tpu_custom_call.1} parent=1 // pred_region
      _
    $region61: #{tpu_custom_call.1} parent=1 // pred_fallthru
      _
    // Predicated region
    $region62: #{tpu_custom_call.1} parent=1 // pred_check
      _
    $region63: #{tpu_custom_call.1} parent=1 // pred_check_branch
      %103 = sbr.rel (0) target = $region65
    $region64: #{tpu_custom_call.1} parent=1 // pred_region
      %104 = dma.done [#allocation3], 64
    $region65: #{tpu_custom_call.1} parent=1 // pred_fallthru
      _
    // Predicated region
    $region66: #{tpu_custom_call.1} parent=1 // pred_check
      _
    $region67: #{tpu_custom_call.1} parent=1 // pred_check_branch
      %106 = sbr.rel (0) target = $region69
    $region68: #{tpu_custom_call.1} parent=1 // pred_region
      %107 = dma.done [#allocation6], 1024
    $region69: #{tpu_custom_call.1} parent=1 // pred_fallthru
      _
    // Predicated region
    $region70: #{tpu_custom_call.1} parent=1 // pred_check
      _
    $region71: #{tpu_custom_call.1} parent=1 // pred_check_branch
      %109 = sbr.rel (0) target = $region73
    $region72: #{tpu_custom_call.1} parent=1 // pred_region
      %110 = dma.done [#allocation6], 16384
    $region73: #{tpu_custom_call.1} parent=1 // pred_fallthru
      _
    // Predicated region
    $region74: #{tpu_custom_call.1} parent=1 // pred_check
      _
    $region75: #{tpu_custom_call.1} parent=1 // pred_check_branch
      %112 = sbr.rel (0) target = $region77
    $region76: #{tpu_custom_call.1} parent=1 // pred_region
      %113 = dma.done [#allocation9], 8192
    $region77: #{tpu_custom_call.1} parent=1 // pred_fallthru
      _
    // Predicated region
    $region78: #{tpu_custom_call.1} parent=1 // pred_check
      _
    $region79: #{tpu_custom_call.1} parent=1 // pred_check_branch
      %115 = sbr.rel (0) target = $region81
    $region80: #{tpu_custom_call.1} parent=1 // pred_region
      %116 = dma.done [#allocation9], 2048
    $region81: #{tpu_custom_call.1} parent=1 // pred_fallthru
      _
    %v118 = vld [vmem:[#allocation2] sm:$0xf]
    %v119 = vld [vmem:[#allocation5] sm:$0xff]
    %v120 = vld [vmem:[#allocation5 + $0x8] sm:$0xff]
    %v121 = vld [vmem:[#allocation5 + $0x10] sm:$0xff]
    %v122 = vld [vmem:[#allocation5 + $0x18] sm:$0xff]
    %v123 = vld [vmem:[#allocation5 + $0x20] sm:$0xff]
    %v124 = vld [vmem:[#allocation5 + $0x28] sm:$0xff]
    %v125 = vld [vmem:[#allocation5 + $0x30] sm:$0xff]
    %v126 = vld [vmem:[#allocation5 + $0x38] sm:$0xff]
    %v127 = vld [vmem:[%s2] sm:$0xf]
    %v129 = vlaneseq
    %v130 = vshrl.u32 %v129, 7
    %v131 = vsub.s32 0, %v130
    %v132 = vrot.slane %v127, %v131
    %v133 = vlaneseq
    %v134 = vshrl.u32 %v133, 7
    %v135 = vsub.s32 1, %v134
    %v136 = vrot.slane %v127, %v135
    %v137 = vlaneseq
    %v138 = vshrl.u32 %v137, 7
    %v139 = vsub.s32 2, %v138
    %v140 = vrot.slane %v127, %v139
    %v141 = vlaneseq
    %v142 = vshrl.u32 %v141, 7
    %v143 = vsub.s32 3, %v142
    %v144 = vrot.slane %v127, %v143
    %v157 = vunpack.c.l.b16 %v119
    %v158 = vunpack.c.h.b16 %v119
    %v159 = vunpack.c.l.b16 %v120
    %v160 = vunpack.c.h.b16 %v120
    %v161 = vunpack.c.l.b16 %v121
    %v162 = vunpack.c.h.b16 %v121
    %v163 = vunpack.c.l.b16 %v122
    %v164 = vunpack.c.h.b16 %v122
    %v165 = vunpack.c.l.b16 %v123
    %v166 = vunpack.c.h.b16 %v123
    %v167 = vunpack.c.l.b16 %v124
    %v168 = vunpack.c.h.b16 %v124
    %v169 = vunpack.c.l.b16 %v125
    %v170 = vunpack.c.h.b16 %v125
    %v171 = vunpack.c.l.b16 %v126
    %v172 = vunpack.c.h.b16 %v126
    %v173 = vpack.c.b16 %v161, %v157
    %v174 = vpack.c.b16 %v162, %v158
    %v175 = vpack.c.b16 %v163, %v159
    %v176 = vpack.c.b16 %v164, %v160
    %v177 = vpack.c.b16 %v169, %v165
    %v178 = vpack.c.b16 %v170, %v166
    %v179 = vpack.c.b16 %v171, %v167
    %v180 = vpack.c.b16 %v172, %v168
    %vm189 = vcmask 261120
    %v191 = vsel %vm189, %v118, 0
    %193 = vmatprep.subr.bf16.mxu0 %v174
    %194 = vmatpush1.bf16.msra.mxu0 %v173
    %195 = vmatprep.subr.bf16.mxu0 %v178
    %196 = vmatpush1.bf16.msra.mxu0 %v177
    %197 = vmatprep.subr.bf16.mxu0 0
    %198 = vmatpush1.bf16.msra.mxu0 0
    %199 = vmatprep.subr.bf16.mxu0 0
    %200 = vmatpush1.bf16.msra.mxu0 0
    %201 = vmatprep.subr.bf16.mxu0 0
    %202 = vmatpush1.bf16.msra.mxu0 0
    %203 = vmatprep.subr.bf16.mxu0 0
    %204 = vmatpush1.bf16.msra.mxu0 0
    %205 = vmatprep.subr.bf16.mxu0 0
    %206 = vmatpush1.bf16.msra.mxu0 0
    %207 = vmatprep.subr.bf16.mxu0 0
    %208 = vmatpush1.bf16.msra.mxu0 0
    %209 = vmatprep.subr.bf16.mxu0 0
    %210 = vmatpush1.bf16.msra.mxu0 0
    %211 = vmatprep.subr.bf16.mxu0 0
    %212 = vmatpush1.bf16.msra.mxu0 0
    %213 = vmatprep.subr.bf16.mxu0 0
    %214 = vmatpush1.bf16.msra.mxu0 0
    %215 = vmatprep.subr.bf16.mxu0 0
    %216 = vmatpush1.bf16.msra.mxu0 0
    %217 = vmatprep.subr.bf16.mxu0 0
    %218 = vmatpush1.bf16.msra.mxu0 0
    %219 = vmatprep.subr.bf16.mxu0 0
    %220 = vmatpush1.bf16.msra.mxu0 0
    %221 = vmatprep.subr.bf16.mxu0 0
    %222 = vmatpush1.bf16.msra.mxu0 0
    %223 = vmatprep.subr.bf16.mxu0 0
    %224 = vmatpush1.bf16.msra.mxu0 0
    %225 = vmatprep.mubr.bf16.mxu0 0
    %226 = vmatmul.mubr.bf16.gmra.mrb[0].mxu0 %v191
    %v227 = vpop.f32.mrb[0].mxu0
    %v228 = vadd.f32 %v132, %v227
    %v229 = vpop.f32.mrb[0].mxu0
    %v230 = vadd.f32 %v136, %v229
    %v231 = vpop.f32.mrb[0].mxu0
    %v232 = vpop.f32.mrb[0].mxu0
    %233 = vdwg.mxu0
    %234 = vmatprep.subr.bf16.mxu0 %v176
    %235 = vmatpush1.bf16.msra.mxu0 %v175
    %236 = vmatprep.subr.bf16.mxu0 %v180
    %237 = vmatpush1.bf16.msra.mxu0 %v179
    %238 = vmatprep.subr.bf16.mxu0 0
    %239 = vmatpush1.bf16.msra.mxu0 0
    %240 = vmatprep.subr.bf16.mxu0 0
    %241 = vmatpush1.bf16.msra.mxu0 0
    %242 = vmatprep.subr.bf16.mxu0 0
    %243 = vmatpush1.bf16.msra.mxu0 0
    %244 = vmatprep.subr.bf16.mxu0 0
    %245 = vmatpush1.bf16.msra.mxu0 0
    %246 = vmatprep.subr.bf16.mxu0 0
    %247 = vmatpush1.bf16.msra.mxu0 0
    %248 = vmatprep.subr.bf16.mxu0 0
    %249 = vmatpush1.bf16.msra.mxu0 0
    %250 = vmatprep.subr.bf16.mxu0 0
    %251 = vmatpush1.bf16.msra.mxu0 0
    %252 = vmatprep.subr.bf16.mxu0 0
    %253 = vmatpush1.bf16.msra.mxu0 0
    %254 = vmatprep.subr.bf16.mxu0 0
    %255 = vmatpush1.bf16.msra.mxu0 0
    %256 = vmatprep.subr.bf16.mxu0 0
    %257 = vmatpush1.bf16.msra.mxu0 0
    %258 = vmatprep.subr.bf16.mxu0 0
    %259 = vmatpush1.bf16.msra.mxu0 0
    %260 = vmatprep.subr.bf16.mxu0 0
    %261 = vmatpush1.bf16.msra.mxu0 0
    %262 = vmatprep.subr.bf16.mxu0 0
    %263 = vmatpush1.bf16.msra.mxu0 0
    %264 = vmatprep.subr.bf16.mxu0 0
    %265 = vmatpush1.bf16.msra.mxu0 0
    %266 = vmatprep.mubr.bf16.mxu0 0
    %267 = vmatmul.mubr.bf16.gmra.mrb[0].mxu0 %v191
    %v268 = vpop.f32.mrb[0].mxu0
    %v269 = vadd.f32 %v140, %v268
    %v270 = vpop.f32.mrb[0].mxu0
    %v271 = vadd.f32 %v144, %v270
    %v272 = vpop.f32.mrb[0].mxu0
    %v273 = vpop.f32.mrb[0].mxu0
    %274 = vdwg.mxu0
    %v275 = vmul.f32 %v228, %v228
    %v276 = vadd.f32 %v228, %v230
    %v277 = vmul.f32 %v230, %v230
    %v278 = vadd.f32 %v275, %v277
    %v279 = vadd.f32 %v276, %v269
    %v280 = vmul.f32 %v269, %v269
    %v281 = vadd.f32 %v278, %v280
    %v282 = vadd.f32 %v279, %v271
    %v283 = vmul.f32 %v271, %v271
    %v284 = vadd.f32 %v281, %v283
    %285 = vadd.xlane.f32.xlu0 %v282
    %v286 = vpop.xlane.xlu0 %285
    %287 = vadd.xlane.f32.xlu0 %v284
    %v288 = vpop.xlane.xlu0 %287
    %v289 = vmul.f32 %v286, 0.001953125
    %v290 = vmul.f32 %v288, 0.001953125
    %v291 = vmul.f32 %v289, %v289
    %v292 = vsub.f32 %v290, %v291
    %v293 = vmax.f32 %v292, 0.0
    %v294 = vadd.f32 %v293, 1e-05
    %v295 = vrsqrt.pop %v294
    %v296 = vld [vmem:[%s3] sm:$0xf]
    %v298 = vlaneseq
    %v299 = vshrl.u32 %v298, 7
    %v300 = vsub.s32 0, %v299
    %v301 = vrot.slane %v296, %v300
    %v302 = vlaneseq
    %v303 = vshrl.u32 %v302, 7
    %v304 = vsub.s32 1, %v303
    %v305 = vrot.slane %v296, %v304
    %v306 = vlaneseq
    %v307 = vshrl.u32 %v306, 7
    %v308 = vsub.s32 2, %v307
    %v309 = vrot.slane %v296, %v308
    %v310 = vlaneseq
    %v311 = vshrl.u32 %v310, 7
    %v312 = vsub.s32 3, %v311
    %v313 = vrot.slane %v296, %v312
    %v318 = vmul.f32 %v295, %v301
    %v319 = vmul.f32 %v295, %v305
    %v320 = vmul.f32 %v295, %v309
    %v321 = vmul.f32 %v295, %v313
    %v322 = vsub.f32 %v228, %v289
    %v323 = vsub.f32 %v230, %v289
    %v324 = vsub.f32 %v269, %v289
    %v325 = vsub.f32 %v271, %v289
    %v326 = vmul.f32 %v322, %v318
    %v327 = vmul.f32 %v323, %v319
    %v328 = vmul.f32 %v324, %v320
    %v329 = vmul.f32 %v325, %v321
    %v330 = vld [vmem:[%s4] sm:$0xf]
    %v332 = vlaneseq
    %v333 = vshrl.u32 %v332, 7
    %v334 = vsub.s32 0, %v333
    %v335 = vrot.slane %v330, %v334
    %v336 = vlaneseq
    %v337 = vshrl.u32 %v336, 7
    %v338 = vsub.s32 1, %v337
    %v339 = vrot.slane %v330, %v338
    %v340 = vlaneseq
    %v341 = vshrl.u32 %v340, 7
    %v342 = vsub.s32 2, %v341
    %v343 = vrot.slane %v330, %v342
    %v344 = vlaneseq
    %v345 = vshrl.u32 %v344, 7
    %v346 = vsub.s32 3, %v345
    %v347 = vrot.slane %v330, %v346
    %v352 = vadd.f32 %v326, %v335
    %v353 = vadd.f32 %v327, %v339
    %v354 = vadd.f32 %v328, %v343
    %v355 = vadd.f32 %v329, %v347
    %v356 = vmax.f32 %v352, 0.0
    %v357 = vmax.f32 %v353, 0.0
    %v358 = vmax.f32 %v354, 0.0
    %v359 = vmax.f32 %v355, 0.0
    %v360 = vpack.c.bf16 %v356, %v356
    %v361 = vpack.c.bf16 %v357, %v357
    %v362 = vpack.c.bf16 %v358, %v358
    %v363 = vpack.c.bf16 %v359, %v359
    %v364 = vld [vmem:[#allocation7] sm:$0xff]
    %v365 = vld [vmem:[#allocation7 + $0x8] sm:$0xff]
    %v366 = vld [vmem:[#allocation7 + $0x10] sm:$0xff]
    %v367 = vld [vmem:[#allocation7 + $0x18] sm:$0xff]
    %v368 = vld [vmem:[#allocation7 + $0x20] sm:$0xff]
    %v369 = vld [vmem:[#allocation7 + $0x28] sm:$0xff]
    %v370 = vld [vmem:[#allocation7 + $0x30] sm:$0xff]
    %v371 = vld [vmem:[#allocation7 + $0x38] sm:$0xff]
    %v372 = vld [vmem:[#allocation7 + $0x40] sm:$0xff]
    %v373 = vld [vmem:[#allocation7 + $0x48] sm:$0xff]
    %v374 = vld [vmem:[#allocation7 + $0x50] sm:$0xff]
    %v375 = vld [vmem:[#allocation7 + $0x58] sm:$0xff]
    %v376 = vld [vmem:[#allocation7 + $0x60] sm:$0xff]
    %v377 = vld [vmem:[#allocation7 + $0x68] sm:$0xff]
    %v378 = vld [vmem:[#allocation7 + $0x70] sm:$0xff]
    %v379 = vld [vmem:[#allocation7 + $0x78] sm:$0xff]
    %v380 = vld [vmem:[#allocation7 + $0x80] sm:$0xff]
    %v381 = vld [vmem:[#allocation7 + $0x88] sm:$0xff]
    %v382 = vld [vmem:[#allocation7 + $0x90] sm:$0xff]
    %v383 = vld [vmem:[#allocation7 + $0x98] sm:$0xff]
    %v384 = vld [vmem:[#allocation7 + $0xa0] sm:$0xff]
    %v385 = vld [vmem:[#allocation7 + $0xa8] sm:$0xff]
    %v386 = vld [vmem:[#allocation7 + $0xb0] sm:$0xff]
    %v387 = vld [vmem:[#allocation7 + $0xb8] sm:$0xff]
    %v388 = vld [vmem:[#allocation7 + $0xc0] sm:$0xff]
    %v389 = vld [vmem:[#allocation7 + $0xc8] sm:$0xff]
    %v390 = vld [vmem:[#allocation7 + $0xd0] sm:$0xff]
    %v391 = vld [vmem:[#allocation7 + $0xd8] sm:$0xff]
    %v392 = vld [vmem:[#allocation7 + $0xe0] sm:$0xff]
    %v393 = vld [vmem:[#allocation7 + $0xe8] sm:$0xff]
    %v394 = vld [vmem:[#allocation7 + $0xf0] sm:$0xff]
    %v395 = vld [vmem:[#allocation7 + $0xf8] sm:$0xff]
    %v396 = vld [vmem:[#allocation7 + $0x100] sm:$0xff]
    %v397 = vld [vmem:[#allocation7 + $0x108] sm:$0xff]
    %v398 = vld [vmem:[#allocation7 + $0x110] sm:$0xff]
    %v399 = vld [vmem:[#allocation7 + $0x118] sm:$0xff]
    %v400 = vld [vmem:[#allocation7 + $0x120] sm:$0xff]
    %v401 = vld [vmem:[#allocation7 + $0x128] sm:$0xff]
    %v402 = vld [vmem:[#allocation7 + $0x130] sm:$0xff]
    %v403 = vld [vmem:[#allocation7 + $0x138] sm:$0xff]
    %v404 = vld [vmem:[#allocation7 + $0x140] sm:$0xff]
    %v405 = vld [vmem:[#allocation7 + $0x148] sm:$0xff]
    %v406 = vld [vmem:[#allocation7 + $0x150] sm:$0xff]
    %v407 = vld [vmem:[#allocation7 + $0x158] sm:$0xff]
    %v408 = vld [vmem:[#allocation7 + $0x160] sm:$0xff]
    %v409 = vld [vmem:[#allocation7 + $0x168] sm:$0xff]
    %v410 = vld [vmem:[#allocation7 + $0x170] sm:$0xff]
    %v411 = vld [vmem:[#allocation7 + $0x178] sm:$0xff]
    %v412 = vld [vmem:[#allocation7 + $0x180] sm:$0xff]
    %v413 = vld [vmem:[#allocation7 + $0x188] sm:$0xff]
    %v414 = vld [vmem:[#allocation7 + $0x190] sm:$0xff]
    %v415 = vld [vmem:[#allocation7 + $0x198] sm:$0xff]
    %v416 = vld [vmem:[#allocation7 + $0x1a0] sm:$0xff]
    %v417 = vld [vmem:[#allocation7 + $0x1a8] sm:$0xff]
    %v418 = vld [vmem:[#allocation7 + $0x1b0] sm:$0xff]
    %v419 = vld [vmem:[#allocation7 + $0x1b8] sm:$0xff]
    %v420 = vld [vmem:[#allocation7 + $0x1c0] sm:$0xff]
    %v421 = vld [vmem:[#allocation7 + $0x1c8] sm:$0xff]
    %v422 = vld [vmem:[#allocation7 + $0x1d0] sm:$0xff]
    %v423 = vld [vmem:[#allocation7 + $0x1d8] sm:$0xff]
    %v424 = vld [vmem:[#allocation7 + $0x1e0] sm:$0xff]
    %v425 = vld [vmem:[#allocation7 + $0x1e8] sm:$0xff]
    %v426 = vld [vmem:[#allocation7 + $0x1f0] sm:$0xff]
    %v427 = vld [vmem:[#allocation7 + $0x1f8] sm:$0xff]
    %v428 = vld [vmem:[#allocation7 + $0x200] sm:$0xff]
    %v429 = vld [vmem:[#allocation7 + $0x208] sm:$0xff]
    %v430 = vld [vmem:[#allocation7 + $0x210] sm:$0xff]
    %v431 = vld [vmem:[#allocation7 + $0x218] sm:$0xff]
    %v432 = vld [vmem:[#allocation7 + $0x220] sm:$0xff]
    %v433 = vld [vmem:[#allocation7 + $0x228] sm:$0xff]
    %v434 = vld [vmem:[#allocation7 + $0x230] sm:$0xff]
    %v435 = vld [vmem:[#allocation7 + $0x238] sm:$0xff]
    %v436 = vld [vmem:[#allocation7 + $0x240] sm:$0xff]
    %v437 = vld [vmem:[#allocation7 + $0x248] sm:$0xff]
    %v438 = vld [vmem:[#allocation7 + $0x250] sm:$0xff]
    %v439 = vld [vmem:[#allocation7 + $0x258] sm:$0xff]
    %v440 = vld [vmem:[#allocation7 + $0x260] sm:$0xff]
    %v441 = vld [vmem:[#allocation7 + $0x268] sm:$0xff]
    %v442 = vld [vmem:[#allocation7 + $0x270] sm:$0xff]
    %v443 = vld [vmem:[#allocation7 + $0x278] sm:$0xff]
    %v444 = vld [vmem:[#allocation7 + $0x280] sm:$0xff]
    %v445 = vld [vmem:[#allocation7 + $0x288] sm:$0xff]
    %v446 = vld [vmem:[#allocation7 + $0x290] sm:$0xff]
    %v447 = vld [vmem:[#allocation7 + $0x298] sm:$0xff]
    %v448 = vld [vmem:[#allocation7 + $0x2a0] sm:$0xff]
    %v449 = vld [vmem:[#allocation7 + $0x2a8] sm:$0xff]
    %v450 = vld [vmem:[#allocation7 + $0x2b0] sm:$0xff]
    %v451 = vld [vmem:[#allocation7 + $0x2b8] sm:$0xff]
    %v452 = vld [vmem:[#allocation7 + $0x2c0] sm:$0xff]
    %v453 = vld [vmem:[#allocation7 + $0x2c8] sm:$0xff]
    %v454 = vld [vmem:[#allocation7 + $0x2d0] sm:$0xff]
    %v455 = vld [vmem:[#allocation7 + $0x2d8] sm:$0xff]
    %v456 = vld [vmem:[#allocation7 + $0x2e0] sm:$0xff]
    %v457 = vld [vmem:[#allocation7 + $0x2e8] sm:$0xff]
    %v458 = vld [vmem:[#allocation7 + $0x2f0] sm:$0xff]
    %v459 = vld [vmem:[#allocation7 + $0x2f8] sm:$0xff]
    %v460 = vld [vmem:[#allocation7 + $0x300] sm:$0xff]
    %v461 = vld [vmem:[#allocation7 + $0x308] sm:$0xff]
    %v462 = vld [vmem:[#allocation7 + $0x310] sm:$0xff]
    %v463 = vld [vmem:[#allocation7 + $0x318] sm:$0xff]
    %v464 = vld [vmem:[#allocation7 + $0x320] sm:$0xff]
    %v465 = vld [vmem:[#allocation7 + $0x328] sm:$0xff]
    %v466 = vld [vmem:[#allocation7 + $0x330] sm:$0xff]
    %v467 = vld [vmem:[#allocation7 + $0x338] sm:$0xff]
    %v468 = vld [vmem:[#allocation7 + $0x340] sm:$0xff]
    %v469 = vld [vmem:[#allocation7 + $0x348] sm:$0xff]
    %v470 = vld [vmem:[#allocation7 + $0x350] sm:$0xff]
    %v471 = vld [vmem:[#allocation7 + $0x358] sm:$0xff]
    %v472 = vld [vmem:[#allocation7 + $0x360] sm:$0xff]
    %v473 = vld [vmem:[#allocation7 + $0x368] sm:$0xff]
    %v474 = vld [vmem:[#allocation7 + $0x370] sm:$0xff]
    %v475 = vld [vmem:[#allocation7 + $0x378] sm:$0xff]
    %v476 = vld [vmem:[#allocation7 + $0x380] sm:$0xff]
    %v477 = vld [vmem:[#allocation7 + $0x388] sm:$0xff]
    %v478 = vld [vmem:[#allocation7 + $0x390] sm:$0xff]
    %v479 = vld [vmem:[#allocation7 + $0x398] sm:$0xff]
    %v480 = vld [vmem:[#allocation7 + $0x3a0] sm:$0xff]
    %v481 = vld [vmem:[#allocation7 + $0x3a8] sm:$0xff]
    %v482 = vld [vmem:[#allocation7 + $0x3b0] sm:$0xff]
    %v483 = vld [vmem:[#allocation7 + $0x3b8] sm:$0xff]
    %v484 = vld [vmem:[#allocation7 + $0x3c0] sm:$0xff]
    %v485 = vld [vmem:[#allocation7 + $0x3c8] sm:$0xff]
    %v486 = vld [vmem:[#allocation7 + $0x3d0] sm:$0xff]
    %v487 = vld [vmem:[#allocation7 + $0x3d8] sm:$0xff]
    %v488 = vld [vmem:[#allocation7 + $0x3e0] sm:$0xff]
    %v489 = vld [vmem:[#allocation7 + $0x3e8] sm:$0xff]
    %v490 = vld [vmem:[#allocation7 + $0x3f0] sm:$0xff]
    %v491 = vld [vmem:[#allocation7 + $0x3f8] sm:$0xff]
    %v492 = vld [vmem:[%s6] sm:$0xf]
    %v494 = vlaneseq
    %v495 = vshrl.u32 %v494, 7
    %v496 = vsub.s32 0, %v495
    %v497 = vrot.slane %v492, %v496
    %v498 = vlaneseq
    %v499 = vshrl.u32 %v498, 7
    %v500 = vsub.s32 1, %v499
    %v501 = vrot.slane %v492, %v500
    %v502 = vlaneseq
    %v503 = vshrl.u32 %v502, 7
    %v504 = vsub.s32 2, %v503
    %v505 = vrot.slane %v492, %v504
    %v506 = vlaneseq
    %v507 = vshrl.u32 %v506, 7
    %v508 = vsub.s32 3, %v507
    %v509 = vrot.slane %v492, %v508
    %v642 = vunpack.c.l.b16 %v364
    %v643 = vunpack.c.h.b16 %v364
    %v644 = vunpack.c.l.b16 %v365
    %v645 = vunpack.c.h.b16 %v365
    %v646 = vunpack.c.l.b16 %v366
    %v647 = vunpack.c.h.b16 %v366
    %v648 = vunpack.c.l.b16 %v367
    %v649 = vunpack.c.h.b16 %v367
    %v650 = vunpack.c.l.b16 %v368
    %v651 = vunpack.c.h.b16 %v368
    %v652 = vunpack.c.l.b16 %v369
    %v653 = vunpack.c.h.b16 %v369
    %v654 = vunpack.c.l.b16 %v370
    %v655 = vunpack.c.h.b16 %v370
    %v656 = vunpack.c.l.b16 %v371
    %v657 = vunpack.c.h.b16 %v371
    %v658 = vunpack.c.l.b16 %v372
    %v659 = vunpack.c.h.b16 %v372
    %v660 = vunpack.c.l.b16 %v373
    %v661 = vunpack.c.h.b16 %v373
    %v662 = vunpack.c.l.b16 %v374
    %v663 = vunpack.c.h.b16 %v374
    %v664 = vunpack.c.l.b16 %v375
    %v665 = vunpack.c.h.b16 %v375
    %v666 = vunpack.c.l.b16 %v376
    %v667 = vunpack.c.h.b16 %v376
    %v668 = vunpack.c.l.b16 %v377
    %v669 = vunpack.c.h.b16 %v377
    %v670 = vunpack.c.l.b16 %v378
    %v671 = vunpack.c.h.b16 %v378
    %v672 = vunpack.c.l.b16 %v379
    %v673 = vunpack.c.h.b16 %v379
    %v674 = vunpack.c.l.b16 %v380
    %v675 = vunpack.c.h.b16 %v380
    %v676 = vunpack.c.l.b16 %v381
    %v677 = vunpack.c.h.b16 %v381
    %v678 = vunpack.c.l.b16 %v382
    %v679 = vunpack.c.h.b16 %v382
    %v680 = vunpack.c.l.b16 %v383
    %v681 = vunpack.c.h.b16 %v383
    %v682 = vunpack.c.l.b16 %v384
    %v683 = vunpack.c.h.b16 %v384
    %v684 = vunpack.c.l.b16 %v385
    %v685 = vunpack.c.h.b16 %v385
    %v686 = vunpack.c.l.b16 %v386
    %v687 = vunpack.c.h.b16 %v386
    %v688 = vunpack.c.l.b16 %v387
    %v689 = vunpack.c.h.b16 %v387
    %v690 = vunpack.c.l.b16 %v388
    %v691 = vunpack.c.h.b16 %v388
    %v692 = vunpack.c.l.b16 %v389
    %v693 = vunpack.c.h.b16 %v389
    %v694 = vunpack.c.l.b16 %v390
    %v695 = vunpack.c.h.b16 %v390
    %v696 = vunpack.c.l.b16 %v391
    %v697 = vunpack.c.h.b16 %v391
    %v698 = vunpack.c.l.b16 %v392
    %v699 = vunpack.c.h.b16 %v392
    %v700 = vunpack.c.l.b16 %v393
    %v701 = vunpack.c.h.b16 %v393
    %v702 = vunpack.c.l.b16 %v394
    %v703 = vunpack.c.h.b16 %v394
    %v704 = vunpack.c.l.b16 %v395
    %v705 = vunpack.c.h.b16 %v395
    %v706 = vunpack.c.l.b16 %v396
    %v707 = vunpack.c.h.b16 %v396
    %v708 = vunpack.c.l.b16 %v397
    %v709 = vunpack.c.h.b16 %v397
    %v710 = vunpack.c.l.b16 %v398
    %v711 = vunpack.c.h.b16 %v398
    %v712 = vunpack.c.l.b16 %v399
    %v713 = vunpack.c.h.b16 %v399
    %v714 = vunpack.c.l.b16 %v400
    %v715 = vunpack.c.h.b16 %v400
    %v716 = vunpack.c.l.b16 %v401
    %v717 = vunpack.c.h.b16 %v401
    %v718 = vunpack.c.l.b16 %v402
    %v719 = vunpack.c.h.b16 %v402
    %v720 = vunpack.c.l.b16 %v403
    %v721 = vunpack.c.h.b16 %v403
    %v722 = vunpack.c.l.b16 %v404
    %v723 = vunpack.c.h.b16 %v404
    %v724 = vunpack.c.l.b16 %v405
    %v725 = vunpack.c.h.b16 %v405
    %v726 = vunpack.c.l.b16 %v406
    %v727 = vunpack.c.h.b16 %v406
    %v728 = vunpack.c.l.b16 %v407
    %v729 = vunpack.c.h.b16 %v407
    %v730 = vunpack.c.l.b16 %v408
    %v731 = vunpack.c.h.b16 %v408
    %v732 = vunpack.c.l.b16 %v409
    %v733 = vunpack.c.h.b16 %v409
    %v734 = vunpack.c.l.b16 %v410
    %v735 = vunpack.c.h.b16 %v410
    %v736 = vunpack.c.l.b16 %v411
    %v737 = vunpack.c.h.b16 %v411
    %v738 = vunpack.c.l.b16 %v412
    %v739 = vunpack.c.h.b16 %v412
    %v740 = vunpack.c.l.b16 %v413
    %v741 = vunpack.c.h.b16 %v413
    %v742 = vunpack.c.l.b16 %v414
    %v743 = vunpack.c.h.b16 %v414
    %v744 = vunpack.c.l.b16 %v415
    %v745 = vunpack.c.h.b16 %v415
    %v746 = vunpack.c.l.b16 %v416
    %v747 = vunpack.c.h.b16 %v416
    %v748 = vunpack.c.l.b16 %v417
    %v749 = vunpack.c.h.b16 %v417
    %v750 = vunpack.c.l.b16 %v418
    %v751 = vunpack.c.h.b16 %v418
    %v752 = vunpack.c.l.b16 %v419
    %v753 = vunpack.c.h.b16 %v419
    %v754 = vunpack.c.l.b16 %v420
    %v755 = vunpack.c.h.b16 %v420
    %v756 = vunpack.c.l.b16 %v421
    %v757 = vunpack.c.h.b16 %v421
    %v758 = vunpack.c.l.b16 %v422
    %v759 = vunpack.c.h.b16 %v422
    %v760 = vunpack.c.l.b16 %v423
    %v761 = vunpack.c.h.b16 %v423
    %v762 = vunpack.c.l.b16 %v424
    %v763 = vunpack.c.h.b16 %v424
    %v764 = vunpack.c.l.b16 %v425
    %v765 = vunpack.c.h.b16 %v425
    %v766 = vunpack.c.l.b16 %v426
    %v767 = vunpack.c.h.b16 %v426
    %v768 = vunpack.c.l.b16 %v427
    %v769 = vunpack.c.h.b16 %v427
    %v770 = vunpack.c.l.b16 %v428
    %v771 = vunpack.c.h.b16 %v428
    %v772 = vunpack.c.l.b16 %v429
    %v773 = vunpack.c.h.b16 %v429
    %v774 = vunpack.c.l.b16 %v430
    %v775 = vunpack.c.h.b16 %v430
    %v776 = vunpack.c.l.b16 %v431
    %v777 = vunpack.c.h.b16 %v431
    %v778 = vunpack.c.l.b16 %v432
    %v779 = vunpack.c.h.b16 %v432
    %v780 = vunpack.c.l.b16 %v433
    %v781 = vunpack.c.h.b16 %v433
    %v782 = vunpack.c.l.b16 %v434
    %v783 = vunpack.c.h.b16 %v434
    %v784 = vunpack.c.l.b16 %v435
    %v785 = vunpack.c.h.b16 %v435
    %v786 = vunpack.c.l.b16 %v436
    %v787 = vunpack.c.h.b16 %v436
    %v788 = vunpack.c.l.b16 %v437
    %v789 = vunpack.c.h.b16 %v437
    %v790 = vunpack.c.l.b16 %v438
    %v791 = vunpack.c.h.b16 %v438
    %v792 = vunpack.c.l.b16 %v439
    %v793 = vunpack.c.h.b16 %v439
    %v794 = vunpack.c.l.b16 %v440
    %v795 = vunpack.c.h.b16 %v440
    %v796 = vunpack.c.l.b16 %v441
    %v797 = vunpack.c.h.b16 %v441
    %v798 = vunpack.c.l.b16 %v442
    %v799 = vunpack.c.h.b16 %v442
    %v800 = vunpack.c.l.b16 %v443
    %v801 = vunpack.c.h.b16 %v443
    %v802 = vunpack.c.l.b16 %v444
    %v803 = vunpack.c.h.b16 %v444
    %v804 = vunpack.c.l.b16 %v445
    %v805 = vunpack.c.h.b16 %v445
    %v806 = vunpack.c.l.b16 %v446
    %v807 = vunpack.c.h.b16 %v446
    %v808 = vunpack.c.l.b16 %v447
    %v809 = vunpack.c.h.b16 %v447
    %v810 = vunpack.c.l.b16 %v448
    %v811 = vunpack.c.h.b16 %v448
    %v812 = vunpack.c.l.b16 %v449
    %v813 = vunpack.c.h.b16 %v449
    %v814 = vunpack.c.l.b16 %v450
    %v815 = vunpack.c.h.b16 %v450
    %v816 = vunpack.c.l.b16 %v451
    %v817 = vunpack.c.h.b16 %v451
    %v818 = vunpack.c.l.b16 %v452
    %v819 = vunpack.c.h.b16 %v452
    %v820 = vunpack.c.l.b16 %v453
    %v821 = vunpack.c.h.b16 %v453
    %v822 = vunpack.c.l.b16 %v454
    %v823 = vunpack.c.h.b16 %v454
    %v824 = vunpack.c.l.b16 %v455
    %v825 = vunpack.c.h.b16 %v455
    %v826 = vunpack.c.l.b16 %v456
    %v827 = vunpack.c.h.b16 %v456
    %v828 = vunpack.c.l.b16 %v457
    %v829 = vunpack.c.h.b16 %v457
    %v830 = vunpack.c.l.b16 %v458
    %v831 = vunpack.c.h.b16 %v458
    %v832 = vunpack.c.l.b16 %v459
    %v833 = vunpack.c.h.b16 %v459
    %v834 = vunpack.c.l.b16 %v460
    %v835 = vunpack.c.h.b16 %v460
    %v836 = vunpack.c.l.b16 %v461
    %v837 = vunpack.c.h.b16 %v461
    %v838 = vunpack.c.l.b16 %v462
    %v839 = vunpack.c.h.b16 %v462
    %v840 = vunpack.c.l.b16 %v463
    %v841 = vunpack.c.h.b16 %v463
    %v842 = vunpack.c.l.b16 %v464
    %v843 = vunpack.c.h.b16 %v464
    %v844 = vunpack.c.l.b16 %v465
    %v845 = vunpack.c.h.b16 %v465
    %v846 = vunpack.c.l.b16 %v466
    %v847 = vunpack.c.h.b16 %v466
    %v848 = vunpack.c.l.b16 %v467
    %v849 = vunpack.c.h.b16 %v467
    %v850 = vunpack.c.l.b16 %v468
    %v851 = vunpack.c.h.b16 %v468
    %v852 = vunpack.c.l.b16 %v469
    %v853 = vunpack.c.h.b16 %v469
    %v854 = vunpack.c.l.b16 %v470
    %v855 = vunpack.c.h.b16 %v470
    %v856 = vunpack.c.l.b16 %v471
    %v857 = vunpack.c.h.b16 %v471
    %v858 = vunpack.c.l.b16 %v472
    %v859 = vunpack.c.h.b16 %v472
    %v860 = vunpack.c.l.b16 %v473
    %v861 = vunpack.c.h.b16 %v473
    %v862 = vunpack.c.l.b16 %v474
    %v863 = vunpack.c.h.b16 %v474
    %v864 = vunpack.c.l.b16 %v475
    %v865 = vunpack.c.h.b16 %v475
    %v866 = vunpack.c.l.b16 %v476
    %v867 = vunpack.c.h.b16 %v476
    %v868 = vunpack.c.l.b16 %v477
    %v869 = vunpack.c.h.b16 %v477
    %v870 = vunpack.c.l.b16 %v478
    %v871 = vunpack.c.h.b16 %v478
    %v872 = vunpack.c.l.b16 %v479
    %v873 = vunpack.c.h.b16 %v479
    %v874 = vunpack.c.l.b16 %v480
    %v875 = vunpack.c.h.b16 %v480
    %v876 = vunpack.c.l.b16 %v481
    %v877 = vunpack.c.h.b16 %v481
    %v878 = vunpack.c.l.b16 %v482
    %v879 = vunpack.c.h.b16 %v482
    %v880 = vunpack.c.l.b16 %v483
    %v881 = vunpack.c.h.b16 %v483
    %v882 = vunpack.c.l.b16 %v484
    %v883 = vunpack.c.h.b16 %v484
    %v884 = vunpack.c.l.b16 %v485
    %v885 = vunpack.c.h.b16 %v485
    %v886 = vunpack.c.l.b16 %v486
    %v887 = vunpack.c.h.b16 %v486
    %v888 = vunpack.c.l.b16 %v487
    %v889 = vunpack.c.h.b16 %v487
    %v890 = vunpack.c.l.b16 %v488
    %v891 = vunpack.c.h.b16 %v488
    %v892 = vunpack.c.l.b16 %v489
    %v893 = vunpack.c.h.b16 %v489
    %v894 = vunpack.c.l.b16 %v490
    %v895 = vunpack.c.h.b16 %v490
    %v896 = vunpack.c.l.b16 %v491
    %v897 = vunpack.c.h.b16 %v491
    %v898 = vpack.c.b16 %v646, %v642
    %v899 = vpack.c.b16 %v647, %v643
    %v900 = vpack.c.b16 %v648, %v644
    %v901 = vpack.c.b16 %v649, %v645
    %v902 = vpack.c.b16 %v654, %v650
    %v903 = vpack.c.b16 %v655, %v651
    %v904 = vpack.c.b16 %v656, %v652
    %v905 = vpack.c.b16 %v657, %v653
    %v906 = vpack.c.b16 %v662, %v658
    %v907 = vpack.c.b16 %v663, %v659
    %v908 = vpack.c.b16 %v664, %v660
    %v909 = vpack.c.b16 %v665, %v661
    %v910 = vpack.c.b16 %v670, %v666
    %v911 = vpack.c.b16 %v671, %v667
    %v912 = vpack.c.b16 %v672, %v668
    %v913 = vpack.c.b16 %v673, %v669
    %v914 = vpack.c.b16 %v678, %v674
    %v915 = vpack.c.b16 %v679, %v675
    %v916 = vpack.c.b16 %v680, %v676
    %v917 = vpack.c.b16 %v681, %v677
    %v918 = vpack.c.b16 %v686, %v682
    %v919 = vpack.c.b16 %v687, %v683
    %v920 = vpack.c.b16 %v688, %v684
    %v921 = vpack.c.b16 %v689, %v685
    %v922 = vpack.c.b16 %v694, %v690
    %v923 = vpack.c.b16 %v695, %v691
    %v924 = vpack.c.b16 %v696, %v692
    %v925 = vpack.c.b16 %v697, %v693
    %v926 = vpack.c.b16 %v702, %v698
    %v927 = vpack.c.b16 %v703, %v699
    %v928 = vpack.c.b16 %v704, %v700
    %v929 = vpack.c.b16 %v705, %v701
    %v930 = vpack.c.b16 %v710, %v706
    %v931 = vpack.c.b16 %v711, %v707
    %v932 = vpack.c.b16 %v712, %v708
    %v933 = vpack.c.b16 %v713, %v709
    %v934 = vpack.c.b16 %v718, %v714
    %v935 = vpack.c.b16 %v719, %v715
    %v936 = vpack.c.b16 %v720, %v716
    %v937 = vpack.c.b16 %v721, %v717
    %v938 = vpack.c.b16 %v726, %v722
    %v939 = vpack.c.b16 %v727, %v723
    %v940 = vpack.c.b16 %v728, %v724
    %v941 = vpack.c.b16 %v729, %v725
    %v942 = vpack.c.b16 %v734, %v730
    %v943 = vpack.c.b16 %v735, %v731
    %v944 = vpack.c.b16 %v736, %v732
    %v945 = vpack.c.b16 %v737, %v733
    %v946 = vpack.c.b16 %v742, %v738
    %v947 = vpack.c.b16 %v743, %v739
    %v948 = vpack.c.b16 %v744, %v740
    %v949 = vpack.c.b16 %v745, %v741
    %v950 = vpack.c.b16 %v750, %v746
    %v951 = vpack.c.b16 %v751, %v747
    %v952 = vpack.c.b16 %v752, %v748
    %v953 = vpack.c.b16 %v753, %v749
    %v954 = vpack.c.b16 %v758, %v754
    %v955 = vpack.c.b16 %v759, %v755
    %v956 = vpack.c.b16 %v760, %v756
    %v957 = vpack.c.b16 %v761, %v757
    %v958 = vpack.c.b16 %v766, %v762
    %v959 = vpack.c.b16 %v767, %v763
    %v960 = vpack.c.b16 %v768, %v764
    %v961 = vpack.c.b16 %v769, %v765
    %v962 = vpack.c.b16 %v774, %v770
    %v963 = vpack.c.b16 %v775, %v771
    %v964 = vpack.c.b16 %v776, %v772
    %v965 = vpack.c.b16 %v777, %v773
    %v966 = vpack.c.b16 %v782, %v778
    %v967 = vpack.c.b16 %v783, %v779
    %v968 = vpack.c.b16 %v784, %v780
    %v969 = vpack.c.b16 %v785, %v781
    %v970 = vpack.c.b16 %v790, %v786
    %v971 = vpack.c.b16 %v791, %v787
    %v972 = vpack.c.b16 %v792, %v788
    %v973 = vpack.c.b16 %v793, %v789
    %v974 = vpack.c.b16 %v798, %v794
    %v975 = vpack.c.b16 %v799, %v795
    %v976 = vpack.c.b16 %v800, %v796
    %v977 = vpack.c.b16 %v801, %v797
    %v978 = vpack.c.b16 %v806, %v802
    %v979 = vpack.c.b16 %v807, %v803
    %v980 = vpack.c.b16 %v808, %v804
    %v981 = vpack.c.b16 %v809, %v805
    %v982 = vpack.c.b16 %v814, %v810
    %v983 = vpack.c.b16 %v815, %v811
    %v984 = vpack.c.b16 %v816, %v812
    %v985 = vpack.c.b16 %v817, %v813
    %v986 = vpack.c.b16 %v822, %v818
    %v987 = vpack.c.b16 %v823, %v819
    %v988 = vpack.c.b16 %v824, %v820
    %v989 = vpack.c.b16 %v825, %v821
    %v990 = vpack.c.b16 %v830, %v826
    %v991 = vpack.c.b16 %v831, %v827
    %v992 = vpack.c.b16 %v832, %v828
    %v993 = vpack.c.b16 %v833, %v829
    %v994 = vpack.c.b16 %v838, %v834
    %v995 = vpack.c.b16 %v839, %v835
    %v996 = vpack.c.b16 %v840, %v836
    %v997 = vpack.c.b16 %v841, %v837
    %v998 = vpack.c.b16 %v846, %v842
    %v999 = vpack.c.b16 %v847, %v843
    %v1000 = vpack.c.b16 %v848, %v844
    %v1001 = vpack.c.b16 %v849, %v845
    %v1002 = vpack.c.b16 %v854, %v850
    %v1003 = vpack.c.b16 %v855, %v851
    %v1004 = vpack.c.b16 %v856, %v852
    %v1005 = vpack.c.b16 %v857, %v853
    %v1006 = vpack.c.b16 %v862, %v858
    %v1007 = vpack.c.b16 %v863, %v859
    %v1008 = vpack.c.b16 %v864, %v860
    %v1009 = vpack.c.b16 %v865, %v861
    %v1010 = vpack.c.b16 %v870, %v866
    %v1011 = vpack.c.b16 %v871, %v867
    %v1012 = vpack.c.b16 %v872, %v868
    %v1013 = vpack.c.b16 %v873, %v869
    %v1014 = vpack.c.b16 %v878, %v874
    %v1015 = vpack.c.b16 %v879, %v875
    %v1016 = vpack.c.b16 %v880, %v876
    %v1017 = vpack.c.b16 %v881, %v877
    %v1018 = vpack.c.b16 %v886, %v882
    %v1019 = vpack.c.b16 %v887, %v883
    %v1020 = vpack.c.b16 %v888, %v884
    %v1021 = vpack.c.b16 %v889, %v885
    %v1022 = vpack.c.b16 %v894, %v890
    %v1023 = vpack.c.b16 %v895, %v891
    %v1024 = vpack.c.b16 %v896, %v892
    %v1025 = vpack.c.b16 %v897, %v893
    %1154 = vmatprep.subr.bf16.mxu0 %v899
    %1155 = vmatpush1.bf16.msra.mxu0 %v898
    %1156 = vmatprep.subr.bf16.mxu0 %v903
    %1157 = vmatpush1.bf16.msra.mxu0 %v902
    %1158 = vmatprep.subr.bf16.mxu0 %v907
    %1159 = vmatpush1.bf16.msra.mxu0 %v906
    %1160 = vmatprep.subr.bf16.mxu0 %v911
    %1161 = vmatpush1.bf16.msra.mxu0 %v910
    %1162 = vmatprep.subr.bf16.mxu0 %v915
    %1163 = vmatpush1.bf16.msra.mxu0 %v914
    %1164 = vmatprep.subr.bf16.mxu0 %v919
    %1165 = vmatpush1.bf16.msra.mxu0 %v918
    %1166 = vmatprep.subr.bf16.mxu0 %v923
    %1167 = vmatpush1.bf16.msra.mxu0 %v922
    %1168 = vmatprep.subr.bf16.mxu0 %v927
    %1169 = vmatpush1.bf16.msra.mxu0 %v926
    %1170 = vmatprep.subr.bf16.mxu0 %v931
    %1171 = vmatpush1.bf16.msra.mxu0 %v930
    %1172 = vmatprep.subr.bf16.mxu0 %v935
    %1173 = vmatpush1.bf16.msra.mxu0 %v934
    %1174 = vmatprep.subr.bf16.mxu0 %v939
    %1175 = vmatpush1.bf16.msra.mxu0 %v938
    %1176 = vmatprep.subr.bf16.mxu0 %v943
    %1177 = vmatpush1.bf16.msra.mxu0 %v942
    %1178 = vmatprep.subr.bf16.mxu0 %v947
    %1179 = vmatpush1.bf16.msra.mxu0 %v946
    %1180 = vmatprep.subr.bf16.mxu0 %v951
    %1181 = vmatpush1.bf16.msra.mxu0 %v950
    %1182 = vmatprep.subr.bf16.mxu0 %v955
    %1183 = vmatpush1.bf16.msra.mxu0 %v954
    %1184 = vmatprep.subr.bf16.mxu0 %v959
    %1185 = vmatpush1.bf16.msra.mxu0 %v958
    %1186 = vmatprep.mubr.bf16.mxu0 %v361
    %1187 = vmatmul.mubr.bf16.gmra.mrb[0].mxu0 %v360
    %v1188 = vpop.f32.mrb[0].mxu0
    %v1189 = vadd.f32 %v497, %v1188
    %v1190 = vpop.f32.mrb[0].mxu0
    %v1191 = vadd.f32 %v501, %v1190
    %v1192 = vpop.f32.mrb[0].mxu0
    %v1193 = vpop.f32.mrb[0].mxu0
    %1194 = vdwg.mxu0
    %1195 = vmatprep.subr.bf16.mxu0 %v963
    %1196 = vmatpush1.bf16.msra.mxu0 %v962
    %1197 = vmatprep.subr.bf16.mxu0 %v967
    %1198 = vmatpush1.bf16.msra.mxu0 %v966
    %1199 = vmatprep.subr.bf16.mxu0 %v971
    %1200 = vmatpush1.bf16.msra.mxu0 %v970
    %1201 = vmatprep.subr.bf16.mxu0 %v975
    %1202 = vmatpush1.bf16.msra.mxu0 %v974
    %1203 = vmatprep.subr.bf16.mxu0 %v979
    %1204 = vmatpush1.bf16.msra.mxu0 %v978
    %1205 = vmatprep.subr.bf16.mxu0 %v983
    %1206 = vmatpush1.bf16.msra.mxu0 %v982
    %1207 = vmatprep.subr.bf16.mxu0 %v987
    %1208 = vmatpush1.bf16.msra.mxu0 %v986
    %1209 = vmatprep.subr.bf16.mxu0 %v991
    %1210 = vmatpush1.bf16.msra.mxu0 %v990
    %1211 = vmatprep.subr.bf16.mxu0 %v995
    %1212 = vmatpush1.bf16.msra.mxu0 %v994
    %1213 = vmatprep.subr.bf16.mxu0 %v999
    %1214 = vmatpush1.bf16.msra.mxu0 %v998
    %1215 = vmatprep.subr.bf16.mxu0 %v1003
    %1216 = vmatpush1.bf16.msra.mxu0 %v1002
    %1217 = vmatprep.subr.bf16.mxu0 %v1007
    %1218 = vmatpush1.bf16.msra.mxu0 %v1006
    %1219 = vmatprep.subr.bf16.mxu0 %v1011
    %1220 = vmatpush1.bf16.msra.mxu0 %v1010
    %1221 = vmatprep.subr.bf16.mxu0 %v1015
    %1222 = vmatpush1.bf16.msra.mxu0 %v1014
    %1223 = vmatprep.subr.bf16.mxu0 %v1019
    %1224 = vmatpush1.bf16.msra.mxu0 %v1018
    %1225 = vmatprep.subr.bf16.mxu0 %v1023
    %1226 = vmatpush1.bf16.msra.mxu0 %v1022
    %1227 = vmatprep.mubr.bf16.mxu0 %v363
    %1228 = vmatmul.mubr.bf16.gmra.mrb[0].mxu0 %v362
    %v1229 = vpop.f32.mrb[0].mxu0
    %v1230 = vadd.f32 %v1189, %v1229
    %v1231 = vpop.f32.mrb[0].mxu0
    %v1232 = vadd.f32 %v1191, %v1231
    %v1233 = vpop.f32.mrb[0].mxu0
    %v1234 = vpop.f32.mrb[0].mxu0
    %1235 = vdwg.mxu0
    %1236 = vmatprep.subr.bf16.mxu0 %v901
    %1237 = vmatpush1.bf16.msra.mxu0 %v900
    %1238 = vmatprep.subr.bf16.mxu0 %v905
    %1239 = vmatpush1.bf16.msra.mxu0 %v904
    %1240 = vmatprep.subr.bf16.mxu0 %v909
    %1241 = vmatpush1.bf16.msra.mxu0 %v908
    %1242 = vmatprep.subr.bf16.mxu0 %v913
    %1243 = vmatpush1.bf16.msra.mxu0 %v912
    %1244 = vmatprep.subr.bf16.mxu0 %v917
    %1245 = vmatpush1.bf16.msra.mxu0 %v916
    %1246 = vmatprep.subr.bf16.mxu0 %v921
    %1247 = vmatpush1.bf16.msra.mxu0 %v920
    %1248 = vmatprep.subr.bf16.mxu0 %v925
    %1249 = vmatpush1.bf16.msra.mxu0 %v924
    %1250 = vmatprep.subr.bf16.mxu0 %v929
    %1251 = vmatpush1.bf16.msra.mxu0 %v928
    %1252 = vmatprep.subr.bf16.mxu0 %v933
    %1253 = vmatpush1.bf16.msra.mxu0 %v932
    %1254 = vmatprep.subr.bf16.mxu0 %v937
    %1255 = vmatpush1.bf16.msra.mxu0 %v936
    %1256 = vmatprep.subr.bf16.mxu0 %v941
    %1257 = vmatpush1.bf16.msra.mxu0 %v940
    %1258 = vmatprep.subr.bf16.mxu0 %v945
    %1259 = vmatpush1.bf16.msra.mxu0 %v944
    %1260 = vmatprep.subr.bf16.mxu0 %v949
    %1261 = vmatpush1.bf16.msra.mxu0 %v948
    %1262 = vmatprep.subr.bf16.mxu0 %v953
    %1263 = vmatpush1.bf16.msra.mxu0 %v952
    %1264 = vmatprep.subr.bf16.mxu0 %v957
    %1265 = vmatpush1.bf16.msra.mxu0 %v956
    %1266 = vmatprep.subr.bf16.mxu0 %v961
    %1267 = vmatpush1.bf16.msra.mxu0 %v960
    %1268 = vmatprep.mubr.bf16.mxu0 %v361
    %1269 = vmatmul.mubr.bf16.gmra.mrb[0].mxu0 %v360
    %v1270 = vpop.f32.mrb[0].mxu0
    %v1271 = vadd.f32 %v505, %v1270
    %v1272 = vpop.f32.mrb[0].mxu0
    %v1273 = vadd.f32 %v509, %v1272
    %v1274 = vpop.f32.mrb[0].mxu0
    %v1275 = vpop.f32.mrb[0].mxu0
    %1276 = vdwg.mxu0
    %1277 = vmatprep.subr.bf16.mxu0 %v965
    %1278 = vmatpush1.bf16.msra.mxu0 %v964
    %1279 = vmatprep.subr.bf16.mxu0 %v969
    %1280 = vmatpush1.bf16.msra.mxu0 %v968
    %1281 = vmatprep.subr.bf16.mxu0 %v973
    %1282 = vmatpush1.bf16.msra.mxu0 %v972
    %1283 = vmatprep.subr.bf16.mxu0 %v977
    %1284 = vmatpush1.bf16.msra.mxu0 %v976
    %1285 = vmatprep.subr.bf16.mxu0 %v981
    %1286 = vmatpush1.bf16.msra.mxu0 %v980
    %1287 = vmatprep.subr.bf16.mxu0 %v985
    %1288 = vmatpush1.bf16.msra.mxu0 %v984
    %1289 = vmatprep.subr.bf16.mxu0 %v989
    %1290 = vmatpush1.bf16.msra.mxu0 %v988
    %1291 = vmatprep.subr.bf16.mxu0 %v993
    %1292 = vmatpush1.bf16.msra.mxu0 %v992
    %1293 = vmatprep.subr.bf16.mxu0 %v997
    %1294 = vmatpush1.bf16.msra.mxu0 %v996
    %1295 = vmatprep.subr.bf16.mxu0 %v1001
    %1296 = vmatpush1.bf16.msra.mxu0 %v1000
    %1297 = vmatprep.subr.bf16.mxu0 %v1005
    %1298 = vmatpush1.bf16.msra.mxu0 %v1004
    %1299 = vmatprep.subr.bf16.mxu0 %v1009
    %1300 = vmatpush1.bf16.msra.mxu0 %v1008
    %1301 = vmatprep.subr.bf16.mxu0 %v1013
    %1302 = vmatpush1.bf16.msra.mxu0 %v1012
    %1303 = vmatprep.subr.bf16.mxu0 %v1017
    %1304 = vmatpush1.bf16.msra.mxu0 %v1016
    %1305 = vmatprep.subr.bf16.mxu0 %v1021
    %1306 = vmatpush1.bf16.msra.mxu0 %v1020
    %1307 = vmatprep.subr.bf16.mxu0 %v1025
    %1308 = vmatpush1.bf16.msra.mxu0 %v1024
    %1309 = vmatprep.mubr.bf16.mxu0 %v363
    %1310 = vmatmul.mubr.bf16.gmra.mrb[0].mxu0 %v362
    %v1311 = vpop.f32.mrb[0].mxu0
    %v1312 = vadd.f32 %v1271, %v1311
    %v1313 = vpop.f32.mrb[0].mxu0
    %v1314 = vadd.f32 %v1273, %v1313
    %v1315 = vpop.f32.mrb[0].mxu0
    %v1316 = vpop.f32.mrb[0].mxu0
    %1317 = vdwg.mxu0
    %v1318 = vmul.f32 %v1230, %v1230
    %v1319 = vadd.f32 %v1230, %v1232
    %v1320 = vmul.f32 %v1232, %v1232
    %v1321 = vadd.f32 %v1318, %v1320
    %v1322 = vadd.f32 %v1319, %v1312
    %v1323 = vmul.f32 %v1312, %v1312
    %v1324 = vadd.f32 %v1321, %v1323
    %v1325 = vadd.f32 %v1322, %v1314
    %v1326 = vmul.f32 %v1314, %v1314
    %v1327 = vadd.f32 %v1324, %v1326
    %1328 = vadd.xlane.f32.xlu0 %v1325
    %v1329 = vpop.xlane.xlu0 %1328
    %1330 = vadd.xlane.f32.xlu0 %v1327
    %v1331 = vpop.xlane.xlu0 %1330
    %v1332 = vmul.f32 %v1329, 0.001953125
    %v1333 = vmul.f32 %v1331, 0.001953125
    %v1334 = vmul.f32 %v1332, %v1332
    %v1335 = vsub.f32 %v1333, %v1334
    %v1336 = vmax.f32 %v1335, 0.0
    %v1337 = vadd.f32 %v1336, 1e-05
    %v1338 = vrsqrt.pop %v1337
    %v1339 = vld [vmem:[%s7] sm:$0xf]
    %v1341 = vlaneseq
    %v1342 = vshrl.u32 %v1341, 7
    %v1343 = vsub.s32 0, %v1342
    %v1344 = vrot.slane %v1339, %v1343
    %v1345 = vlaneseq
    %v1346 = vshrl.u32 %v1345, 7
    %v1347 = vsub.s32 1, %v1346
    %v1348 = vrot.slane %v1339, %v1347
    %v1349 = vlaneseq
    %v1350 = vshrl.u32 %v1349, 7
    %v1351 = vsub.s32 2, %v1350
    %v1352 = vrot.slane %v1339, %v1351
    %v1353 = vlaneseq
    %v1354 = vshrl.u32 %v1353, 7
    %v1355 = vsub.s32 3, %v1354
    %v1356 = vrot.slane %v1339, %v1355
    %v1361 = vmul.f32 %v1338, %v1344
    %v1362 = vmul.f32 %v1338, %v1348
    %v1363 = vmul.f32 %v1338, %v1352
    %v1364 = vmul.f32 %v1338, %v1356
    %v1365 = vsub.f32 %v1230, %v1332
    %v1366 = vsub.f32 %v1232, %v1332
    %v1367 = vsub.f32 %v1312, %v1332
    %v1368 = vsub.f32 %v1314, %v1332
    %v1369 = vmul.f32 %v1365, %v1361
    %v1370 = vmul.f32 %v1366, %v1362
    %v1371 = vmul.f32 %v1367, %v1363
    %v1372 = vmul.f32 %v1368, %v1364
    %v1373 = vld [vmem:[%s8] sm:$0xf]
    %v1375 = vlaneseq
    %v1376 = vshrl.u32 %v1375, 7
    %v1377 = vsub.s32 0, %v1376
    %v1378 = vrot.slane %v1373, %v1377
    %v1379 = vlaneseq
    %v1380 = vshrl.u32 %v1379, 7
    %v1381 = vsub.s32 1, %v1380
    %v1382 = vrot.slane %v1373, %v1381
    %v1383 = vlaneseq
    %v1384 = vshrl.u32 %v1383, 7
    %v1385 = vsub.s32 2, %v1384
    %v1386 = vrot.slane %v1373, %v1385
    %v1387 = vlaneseq
    %v1388 = vshrl.u32 %v1387, 7
    %v1389 = vsub.s32 3, %v1388
    %v1390 = vrot.slane %v1373, %v1389
    %v1395 = vadd.f32 %v1369, %v1378
    %v1396 = vadd.f32 %v1370, %v1382
    %v1397 = vadd.f32 %v1371, %v1386
    %v1398 = vadd.f32 %v1372, %v1390
    %v1399 = vmax.f32 %v1395, 0.0
    %v1400 = vmax.f32 %v1396, 0.0
    %v1401 = vmax.f32 %v1397, 0.0
    %v1402 = vmax.f32 %v1398, 0.0
    %v1403 = vpack.c.bf16 %v1399, %v1399
    %v1404 = vpack.c.bf16 %v1400, %v1400
    %v1405 = vpack.c.bf16 %v1401, %v1401
    %v1406 = vpack.c.bf16 %v1402, %v1402
    %v1407 = vld [vmem:[#allocation8] sm:$0xff]
    %v1408 = vld [vmem:[#allocation8 + $0x8] sm:$0xff]
    %v1409 = vld [vmem:[#allocation8 + $0x10] sm:$0xff]
    %v1410 = vld [vmem:[#allocation8 + $0x18] sm:$0xff]
    %v1411 = vld [vmem:[#allocation8 + $0x20] sm:$0xff]
    %v1412 = vld [vmem:[#allocation8 + $0x28] sm:$0xff]
    %v1413 = vld [vmem:[#allocation8 + $0x30] sm:$0xff]
    %v1414 = vld [vmem:[#allocation8 + $0x38] sm:$0xff]
    %v1415 = vld [vmem:[#allocation8 + $0x40] sm:$0xff]
    %v1416 = vld [vmem:[#allocation8 + $0x48] sm:$0xff]
    %v1417 = vld [vmem:[#allocation8 + $0x50] sm:$0xff]
    %v1418 = vld [vmem:[#allocation8 + $0x58] sm:$0xff]
    %v1419 = vld [vmem:[#allocation8 + $0x60] sm:$0xff]
    %v1420 = vld [vmem:[#allocation8 + $0x68] sm:$0xff]
    %v1421 = vld [vmem:[#allocation8 + $0x70] sm:$0xff]
    %v1422 = vld [vmem:[#allocation8 + $0x78] sm:$0xff]
    %v1423 = vld [vmem:[#allocation8 + $0x80] sm:$0xff]
    %v1424 = vld [vmem:[#allocation8 + $0x88] sm:$0xff]
    %v1425 = vld [vmem:[#allocation8 + $0x90] sm:$0xff]
    %v1426 = vld [vmem:[#allocation8 + $0x98] sm:$0xff]
    %v1427 = vld [vmem:[#allocation8 + $0xa0] sm:$0xff]
    %v1428 = vld [vmem:[#allocation8 + $0xa8] sm:$0xff]
    %v1429 = vld [vmem:[#allocation8 + $0xb0] sm:$0xff]
    %v1430 = vld [vmem:[#allocation8 + $0xb8] sm:$0xff]
    %v1431 = vld [vmem:[#allocation8 + $0xc0] sm:$0xff]
    %v1432 = vld [vmem:[#allocation8 + $0xc8] sm:$0xff]
    %v1433 = vld [vmem:[#allocation8 + $0xd0] sm:$0xff]
    %v1434 = vld [vmem:[#allocation8 + $0xd8] sm:$0xff]
    %v1435 = vld [vmem:[#allocation8 + $0xe0] sm:$0xff]
    %v1436 = vld [vmem:[#allocation8 + $0xe8] sm:$0xff]
    %v1437 = vld [vmem:[#allocation8 + $0xf0] sm:$0xff]
    %v1438 = vld [vmem:[#allocation8 + $0xf8] sm:$0xff]
    %v1439 = vld [vmem:[#allocation8 + $0x100] sm:$0xff]
    %v1440 = vld [vmem:[#allocation8 + $0x108] sm:$0xff]
    %v1441 = vld [vmem:[#allocation8 + $0x110] sm:$0xff]
    %v1442 = vld [vmem:[#allocation8 + $0x118] sm:$0xff]
    %v1443 = vld [vmem:[#allocation8 + $0x120] sm:$0xff]
    %v1444 = vld [vmem:[#allocation8 + $0x128] sm:$0xff]
    %v1445 = vld [vmem:[#allocation8 + $0x130] sm:$0xff]
    %v1446 = vld [vmem:[#allocation8 + $0x138] sm:$0xff]
    %v1447 = vld [vmem:[#allocation8 + $0x140] sm:$0xff]
    %v1448 = vld [vmem:[#allocation8 + $0x148] sm:$0xff]
    %v1449 = vld [vmem:[#allocation8 + $0x150] sm:$0xff]
    %v1450 = vld [vmem:[#allocation8 + $0x158] sm:$0xff]
    %v1451 = vld [vmem:[#allocation8 + $0x160] sm:$0xff]
    %v1452 = vld [vmem:[#allocation8 + $0x168] sm:$0xff]
    %v1453 = vld [vmem:[#allocation8 + $0x170] sm:$0xff]
    %v1454 = vld [vmem:[#allocation8 + $0x178] sm:$0xff]
    %v1455 = vld [vmem:[#allocation8 + $0x180] sm:$0xff]
    %v1456 = vld [vmem:[#allocation8 + $0x188] sm:$0xff]
    %v1457 = vld [vmem:[#allocation8 + $0x190] sm:$0xff]
    %v1458 = vld [vmem:[#allocation8 + $0x198] sm:$0xff]
    %v1459 = vld [vmem:[#allocation8 + $0x1a0] sm:$0xff]
    %v1460 = vld [vmem:[#allocation8 + $0x1a8] sm:$0xff]
    %v1461 = vld [vmem:[#allocation8 + $0x1b0] sm:$0xff]
    %v1462 = vld [vmem:[#allocation8 + $0x1b8] sm:$0xff]
    %v1463 = vld [vmem:[#allocation8 + $0x1c0] sm:$0xff]
    %v1464 = vld [vmem:[#allocation8 + $0x1c8] sm:$0xff]
    %v1465 = vld [vmem:[#allocation8 + $0x1d0] sm:$0xff]
    %v1466 = vld [vmem:[#allocation8 + $0x1d8] sm:$0xff]
    %v1467 = vld [vmem:[#allocation8 + $0x1e0] sm:$0xff]
    %v1468 = vld [vmem:[#allocation8 + $0x1e8] sm:$0xff]
    %v1469 = vld [vmem:[#allocation8 + $0x1f0] sm:$0xff]
    %v1470 = vld [vmem:[#allocation8 + $0x1f8] sm:$0xff]
    %v1471 = vld [vmem:[%s10] sm:$0x3]
    %v1473 = vlaneseq
    %v1474 = vshrl.u32 %v1473, 7
    %v1475 = vsub.s32 0, %v1474
    %v1476 = vrot.slane %v1471, %v1475
    %v1477 = vlaneseq
    %v1478 = vshrl.u32 %v1477, 7
    %v1479 = vsub.s32 1, %v1478
    %v1480 = vrot.slane %v1471, %v1479
    %v1547 = vunpack.c.l.b16 %v1407
    %v1548 = vunpack.c.h.b16 %v1407
    %v1549 = vunpack.c.l.b16 %v1408
    %v1550 = vunpack.c.h.b16 %v1408
    %v1551 = vunpack.c.l.b16 %v1409
    %v1552 = vunpack.c.h.b16 %v1409
    %v1553 = vunpack.c.l.b16 %v1410
    %v1554 = vunpack.c.h.b16 %v1410
    %v1555 = vunpack.c.l.b16 %v1411
    %v1556 = vunpack.c.h.b16 %v1411
    %v1557 = vunpack.c.l.b16 %v1412
    %v1558 = vunpack.c.h.b16 %v1412
    %v1559 = vunpack.c.l.b16 %v1413
    %v1560 = vunpack.c.h.b16 %v1413
    %v1561 = vunpack.c.l.b16 %v1414
    %v1562 = vunpack.c.h.b16 %v1414
    %v1563 = vunpack.c.l.b16 %v1415
    %v1564 = vunpack.c.h.b16 %v1415
    %v1565 = vunpack.c.l.b16 %v1416
    %v1566 = vunpack.c.h.b16 %v1416
    %v1567 = vunpack.c.l.b16 %v1417
    %v1568 = vunpack.c.h.b16 %v1417
    %v1569 = vunpack.c.l.b16 %v1418
    %v1570 = vunpack.c.h.b16 %v1418
    %v1571 = vunpack.c.l.b16 %v1419
    %v1572 = vunpack.c.h.b16 %v1419
    %v1573 = vunpack.c.l.b16 %v1420
    %v1574 = vunpack.c.h.b16 %v1420
    %v1575 = vunpack.c.l.b16 %v1421
    %v1576 = vunpack.c.h.b16 %v1421
    %v1577 = vunpack.c.l.b16 %v1422
    %v1578 = vunpack.c.h.b16 %v1422
    %v1579 = vunpack.c.l.b16 %v1423
    %v1580 = vunpack.c.h.b16 %v1423
    %v1581 = vunpack.c.l.b16 %v1424
    %v1582 = vunpack.c.h.b16 %v1424
    %v1583 = vunpack.c.l.b16 %v1425
    %v1584 = vunpack.c.h.b16 %v1425
    %v1585 = vunpack.c.l.b16 %v1426
    %v1586 = vunpack.c.h.b16 %v1426
    %v1587 = vunpack.c.l.b16 %v1427
    %v1588 = vunpack.c.h.b16 %v1427
    %v1589 = vunpack.c.l.b16 %v1428
    %v1590 = vunpack.c.h.b16 %v1428
    %v1591 = vunpack.c.l.b16 %v1429
    %v1592 = vunpack.c.h.b16 %v1429
    %v1593 = vunpack.c.l.b16 %v1430
    %v1594 = vunpack.c.h.b16 %v1430
    %v1595 = vunpack.c.l.b16 %v1431
    %v1596 = vunpack.c.h.b16 %v1431
    %v1597 = vunpack.c.l.b16 %v1432
    %v1598 = vunpack.c.h.b16 %v1432
    %v1599 = vunpack.c.l.b16 %v1433
    %v1600 = vunpack.c.h.b16 %v1433
    %v1601 = vunpack.c.l.b16 %v1434
    %v1602 = vunpack.c.h.b16 %v1434
    %v1603 = vunpack.c.l.b16 %v1435
    %v1604 = vunpack.c.h.b16 %v1435
    %v1605 = vunpack.c.l.b16 %v1436
    %v1606 = vunpack.c.h.b16 %v1436
    %v1607 = vunpack.c.l.b16 %v1437
    %v1608 = vunpack.c.h.b16 %v1437
    %v1609 = vunpack.c.l.b16 %v1438
    %v1610 = vunpack.c.h.b16 %v1438
    %v1611 = vunpack.c.l.b16 %v1439
    %v1612 = vunpack.c.h.b16 %v1439
    %v1613 = vunpack.c.l.b16 %v1440
    %v1614 = vunpack.c.h.b16 %v1440
    %v1615 = vunpack.c.l.b16 %v1441
    %v1616 = vunpack.c.h.b16 %v1441
    %v1617 = vunpack.c.l.b16 %v1442
    %v1618 = vunpack.c.h.b16 %v1442
    %v1619 = vunpack.c.l.b16 %v1443
    %v1620 = vunpack.c.h.b16 %v1443
    %v1621 = vunpack.c.l.b16 %v1444
    %v1622 = vunpack.c.h.b16 %v1444
    %v1623 = vunpack.c.l.b16 %v1445
    %v1624 = vunpack.c.h.b16 %v1445
    %v1625 = vunpack.c.l.b16 %v1446
    %v1626 = vunpack.c.h.b16 %v1446
    %v1627 = vunpack.c.l.b16 %v1447
    %v1628 = vunpack.c.h.b16 %v1447
    %v1629 = vunpack.c.l.b16 %v1448
    %v1630 = vunpack.c.h.b16 %v1448
    %v1631 = vunpack.c.l.b16 %v1449
    %v1632 = vunpack.c.h.b16 %v1449
    %v1633 = vunpack.c.l.b16 %v1450
    %v1634 = vunpack.c.h.b16 %v1450
    %v1635 = vunpack.c.l.b16 %v1451
    %v1636 = vunpack.c.h.b16 %v1451
    %v1637 = vunpack.c.l.b16 %v1452
    %v1638 = vunpack.c.h.b16 %v1452
    %v1639 = vunpack.c.l.b16 %v1453
    %v1640 = vunpack.c.h.b16 %v1453
    %v1641 = vunpack.c.l.b16 %v1454
    %v1642 = vunpack.c.h.b16 %v1454
    %v1643 = vunpack.c.l.b16 %v1455
    %v1644 = vunpack.c.h.b16 %v1455
    %v1645 = vunpack.c.l.b16 %v1456
    %v1646 = vunpack.c.h.b16 %v1456
    %v1647 = vunpack.c.l.b16 %v1457
    %v1648 = vunpack.c.h.b16 %v1457
    %v1649 = vunpack.c.l.b16 %v1458
    %v1650 = vunpack.c.h.b16 %v1458
    %v1651 = vunpack.c.l.b16 %v1459
    %v1652 = vunpack.c.h.b16 %v1459
    %v1653 = vunpack.c.l.b16 %v1460
    %v1654 = vunpack.c.h.b16 %v1460
    %v1655 = vunpack.c.l.b16 %v1461
    %v1656 = vunpack.c.h.b16 %v1461
    %v1657 = vunpack.c.l.b16 %v1462
    %v1658 = vunpack.c.h.b16 %v1462
    %v1659 = vunpack.c.l.b16 %v1463
    %v1660 = vunpack.c.h.b16 %v1463
    %v1661 = vunpack.c.l.b16 %v1464
    %v1662 = vunpack.c.h.b16 %v1464
    %v1663 = vunpack.c.l.b16 %v1465
    %v1664 = vunpack.c.h.b16 %v1465
    %v1665 = vunpack.c.l.b16 %v1466
    %v1666 = vunpack.c.h.b16 %v1466
    %v1667 = vunpack.c.l.b16 %v1467
    %v1668 = vunpack.c.h.b16 %v1467
    %v1669 = vunpack.c.l.b16 %v1468
    %v1670 = vunpack.c.h.b16 %v1468
    %v1671 = vunpack.c.l.b16 %v1469
    %v1672 = vunpack.c.h.b16 %v1469
    %v1673 = vunpack.c.l.b16 %v1470
    %v1674 = vunpack.c.h.b16 %v1470
    %v1675 = vpack.c.b16 %v1549, %v1547
    %v1676 = vpack.c.b16 %v1550, %v1548
    %v1677 = vpack.c.b16 %v1553, %v1551
    %v1678 = vpack.c.b16 %v1554, %v1552
    %v1679 = vpack.c.b16 %v1557, %v1555
    %v1680 = vpack.c.b16 %v1558, %v1556
    %v1681 = vpack.c.b16 %v1561, %v1559
    %v1682 = vpack.c.b16 %v1562, %v1560
    %v1683 = vpack.c.b16 %v1565, %v1563
    %v1684 = vpack.c.b16 %v1566, %v1564
    %v1685 = vpack.c.b16 %v1569, %v1567
    %v1686 = vpack.c.b16 %v1570, %v1568
    %v1687 = vpack.c.b16 %v1573, %v1571
    %v1688 = vpack.c.b16 %v1574, %v1572
    %v1689 = vpack.c.b16 %v1577, %v1575
    %v1690 = vpack.c.b16 %v1578, %v1576
    %v1691 = vpack.c.b16 %v1581, %v1579
    %v1692 = vpack.c.b16 %v1582, %v1580
    %v1693 = vpack.c.b16 %v1585, %v1583
    %v1694 = vpack.c.b16 %v1586, %v1584
    %v1695 = vpack.c.b16 %v1589, %v1587
    %v1696 = vpack.c.b16 %v1590, %v1588
    %v1697 = vpack.c.b16 %v1593, %v1591
    %v1698 = vpack.c.b16 %v1594, %v1592
    %v1699 = vpack.c.b16 %v1597, %v1595
    %v1700 = vpack.c.b16 %v1598, %v1596
    %v1701 = vpack.c.b16 %v1601, %v1599
    %v1702 = vpack.c.b16 %v1602, %v1600
    %v1703 = vpack.c.b16 %v1605, %v1603
    %v1704 = vpack.c.b16 %v1606, %v1604
    %v1705 = vpack.c.b16 %v1609, %v1607
    %v1706 = vpack.c.b16 %v1610, %v1608
    %v1707 = vpack.c.b16 %v1613, %v1611
    %v1708 = vpack.c.b16 %v1614, %v1612
    %v1709 = vpack.c.b16 %v1617, %v1615
    %v1710 = vpack.c.b16 %v1618, %v1616
    %v1711 = vpack.c.b16 %v1621, %v1619
    %v1712 = vpack.c.b16 %v1622, %v1620
    %v1713 = vpack.c.b16 %v1625, %v1623
    %v1714 = vpack.c.b16 %v1626, %v1624
    %v1715 = vpack.c.b16 %v1629, %v1627
    %v1716 = vpack.c.b16 %v1630, %v1628
    %v1717 = vpack.c.b16 %v1633, %v1631
    %v1718 = vpack.c.b16 %v1634, %v1632
    %v1719 = vpack.c.b16 %v1637, %v1635
    %v1720 = vpack.c.b16 %v1638, %v1636
    %v1721 = vpack.c.b16 %v1641, %v1639
    %v1722 = vpack.c.b16 %v1642, %v1640
    %v1723 = vpack.c.b16 %v1645, %v1643
    %v1724 = vpack.c.b16 %v1646, %v1644
    %v1725 = vpack.c.b16 %v1649, %v1647
    %v1726 = vpack.c.b16 %v1650, %v1648
    %v1727 = vpack.c.b16 %v1653, %v1651
    %v1728 = vpack.c.b16 %v1654, %v1652
    %v1729 = vpack.c.b16 %v1657, %v1655
    %v1730 = vpack.c.b16 %v1658, %v1656
    %v1731 = vpack.c.b16 %v1661, %v1659
    %v1732 = vpack.c.b16 %v1662, %v1660
    %v1733 = vpack.c.b16 %v1665, %v1663
    %v1734 = vpack.c.b16 %v1666, %v1664
    %v1735 = vpack.c.b16 %v1669, %v1667
    %v1736 = vpack.c.b16 %v1670, %v1668
    %v1737 = vpack.c.b16 %v1673, %v1671
    %v1738 = vpack.c.b16 %v1674, %v1672
    %1803 = vmatprep.subr.bf16.mxu0 %v1676
    %1804 = vmatpush1.bf16.msra.mxu0 %v1675
    %1805 = vmatprep.subr.bf16.mxu0 %v1678
    %1806 = vmatpush1.bf16.msra.mxu0 %v1677
    %1807 = vmatprep.subr.bf16.mxu0 %v1680
    %1808 = vmatpush1.bf16.msra.mxu0 %v1679
    %1809 = vmatprep.subr.bf16.mxu0 %v1682
    %1810 = vmatpush1.bf16.msra.mxu0 %v1681
    %1811 = vmatprep.subr.bf16.mxu0 %v1684
    %1812 = vmatpush1.bf16.msra.mxu0 %v1683
    %1813 = vmatprep.subr.bf16.mxu0 %v1686
    %1814 = vmatpush1.bf16.msra.mxu0 %v1685
    %1815 = vmatprep.subr.bf16.mxu0 %v1688
    %1816 = vmatpush1.bf16.msra.mxu0 %v1687
    %1817 = vmatprep.subr.bf16.mxu0 %v1690
    %1818 = vmatpush1.bf16.msra.mxu0 %v1689
    %1819 = vmatprep.subr.bf16.mxu0 %v1692
    %1820 = vmatpush1.bf16.msra.mxu0 %v1691
    %1821 = vmatprep.subr.bf16.mxu0 %v1694
    %1822 = vmatpush1.bf16.msra.mxu0 %v1693
    %1823 = vmatprep.subr.bf16.mxu0 %v1696
    %1824 = vmatpush1.bf16.msra.mxu0 %v1695
    %1825 = vmatprep.subr.bf16.mxu0 %v1698
    %1826 = vmatpush1.bf16.msra.mxu0 %v1697
    %1827 = vmatprep.subr.bf16.mxu0 %v1700
    %1828 = vmatpush1.bf16.msra.mxu0 %v1699
    %1829 = vmatprep.subr.bf16.mxu0 %v1702
    %1830 = vmatpush1.bf16.msra.mxu0 %v1701
    %1831 = vmatprep.subr.bf16.mxu0 %v1704
    %1832 = vmatpush1.bf16.msra.mxu0 %v1703
    %1833 = vmatprep.subr.bf16.mxu0 %v1706
    %1834 = vmatpush1.bf16.msra.mxu0 %v1705
    %1835 = vmatprep.mubr.bf16.mxu0 %v1404
    %1836 = vmatmul.mubr.bf16.gmra.mrb[0].mxu0 %v1403
    %v1837 = vpop.f32.mrb[0].mxu0
    %v1838 = vadd.f32 %v1476, %v1837
    %v1839 = vpop.f32.mrb[0].mxu0
    %v1840 = vadd.f32 %v1480, %v1839
    %v1841 = vpop.f32.mrb[0].mxu0
    %v1842 = vpop.f32.mrb[0].mxu0
    %1843 = vdwg.mxu0
    %1844 = vmatprep.subr.bf16.mxu0 %v1708
    %1845 = vmatpush1.bf16.msra.mxu0 %v1707
    %1846 = vmatprep.subr.bf16.mxu0 %v1710
    %1847 = vmatpush1.bf16.msra.mxu0 %v1709
    %1848 = vmatprep.subr.bf16.mxu0 %v1712
    %1849 = vmatpush1.bf16.msra.mxu0 %v1711
    %1850 = vmatprep.subr.bf16.mxu0 %v1714
    %1851 = vmatpush1.bf16.msra.mxu0 %v1713
    %1852 = vmatprep.subr.bf16.mxu0 %v1716
    %1853 = vmatpush1.bf16.msra.mxu0 %v1715
    %1854 = vmatprep.subr.bf16.mxu0 %v1718
    %1855 = vmatpush1.bf16.msra.mxu0 %v1717
    %1856 = vmatprep.subr.bf16.mxu0 %v1720
    %1857 = vmatpush1.bf16.msra.mxu0 %v1719
    %1858 = vmatprep.subr.bf16.mxu0 %v1722
    %1859 = vmatpush1.bf16.msra.mxu0 %v1721
    %1860 = vmatprep.subr.bf16.mxu0 %v1724
    %1861 = vmatpush1.bf16.msra.mxu0 %v1723
    %1862 = vmatprep.subr.bf16.mxu0 %v1726
    %1863 = vmatpush1.bf16.msra.mxu0 %v1725
    %1864 = vmatprep.subr.bf16.mxu0 %v1728
    %1865 = vmatpush1.bf16.msra.mxu0 %v1727
    %1866 = vmatprep.subr.bf16.mxu0 %v1730
    %1867 = vmatpush1.bf16.msra.mxu0 %v1729
    %1868 = vmatprep.subr.bf16.mxu0 %v1732
    %1869 = vmatpush1.bf16.msra.mxu0 %v1731
    %1870 = vmatprep.subr.bf16.mxu0 %v1734
    %1871 = vmatpush1.bf16.msra.mxu0 %v1733
    %1872 = vmatprep.subr.bf16.mxu0 %v1736
    %1873 = vmatpush1.bf16.msra.mxu0 %v1735
    %1874 = vmatprep.subr.bf16.mxu0 %v1738
    %1875 = vmatpush1.bf16.msra.mxu0 %v1737
    %1876 = vmatprep.mubr.bf16.mxu0 %v1406
    %1877 = vmatmul.mubr.bf16.gmra.mrb[0].mxu0 %v1405
    %v1878 = vpop.f32.mrb[0].mxu0
    %v1879 = vadd.f32 %v1838, %v1878
    %v1880 = vpop.f32.mrb[0].mxu0
    %v1881 = vadd.f32 %v1840, %v1880
    %v1882 = vpop.f32.mrb[0].mxu0
    %v1883 = vpop.f32.mrb[0].mxu0
    %1884 = vdwg.mxu0
    %v1885 = vmul.f32 %v1879, %v1879
    %v1886 = vadd.f32 %v1879, %v1881
    %v1887 = vmul.f32 %v1881, %v1881
    %v1888 = vadd.f32 %v1885, %v1887
    %1889 = vadd.xlane.f32.xlu0 %v1886
    %v1890 = vpop.xlane.xlu0 %1889
    %1891 = vadd.xlane.f32.xlu0 %v1888
    %v1892 = vpop.xlane.xlu0 %1891
    %v1893 = vmul.f32 %v1890, 0.00390625
    %v1894 = vmul.f32 %v1892, 0.00390625
    %v1895 = vmul.f32 %v1893, %v1893
    %v1896 = vsub.f32 %v1894, %v1895
    %v1897 = vmax.f32 %v1896, 0.0
    %v1898 = vadd.f32 %v1897, 1e-05
    %v1899 = vrsqrt.pop %v1898
    %v1900 = vld [vmem:[%s11] sm:$0x3]
    %v1902 = vlaneseq
    %v1903 = vshrl.u32 %v1902, 7
    %v1904 = vsub.s32 0, %v1903
    %v1905 = vrot.slane %v1900, %v1904
    %v1906 = vlaneseq
    %v1907 = vshrl.u32 %v1906, 7
    %v1908 = vsub.s32 1, %v1907
    %v1909 = vrot.slane %v1900, %v1908
    %v1912 = vmul.f32 %v1899, %v1905
    %v1913 = vmul.f32 %v1899, %v1909
    %v1914 = vsub.f32 %v1879, %v1893
    %v1915 = vsub.f32 %v1881, %v1893
    %v1916 = vmul.f32 %v1914, %v1912
    %v1917 = vmul.f32 %v1915, %v1913
    %v1918 = vld [vmem:[%s12] sm:$0x3]
    %v1920 = vlaneseq
    %v1921 = vshrl.u32 %v1920, 7
    %v1922 = vsub.s32 0, %v1921
    %v1923 = vrot.slane %v1918, %v1922
    %v1924 = vlaneseq
    %v1925 = vshrl.u32 %v1924, 7
    %v1926 = vsub.s32 1, %v1925
    %v1927 = vrot.slane %v1918, %v1926
    %v1930 = vadd.f32 %v1916, %v1923
    %v1931 = vadd.f32 %v1917, %v1927
    %v1932 = vmax.f32 %v1930, 0.0
    %v1933 = vmax.f32 %v1931, 0.0
    %v1934 = vpack.c.bf16 %v1932, %v1932
    %v1935 = vpack.c.bf16 %v1933, %v1933
    %v1936 = vld [vmem:[#allocation10] sm:$0xf]
    %v1937 = vld [vmem:[#allocation10 + $0x4] sm:$0xf]
    %v1938 = vld [vmem:[#allocation10 + $0x8] sm:$0xf]
    %v1939 = vld [vmem:[#allocation10 + $0xc] sm:$0xf]
    %v1940 = vld [vmem:[#allocation10 + $0x10] sm:$0xf]
    %v1941 = vld [vmem:[#allocation10 + $0x14] sm:$0xf]
    %v1942 = vld [vmem:[#allocation10 + $0x18] sm:$0xf]
    %v1943 = vld [vmem:[#allocation10 + $0x1c] sm:$0xf]
    %v1944 = vld [vmem:[#allocation10 + $0x20] sm:$0xf]
    %v1945 = vld [vmem:[#allocation10 + $0x24] sm:$0xf]
    %v1946 = vld [vmem:[#allocation10 + $0x28] sm:$0xf]
    %v1947 = vld [vmem:[#allocation10 + $0x2c] sm:$0xf]
    %v1948 = vld [vmem:[#allocation10 + $0x30] sm:$0xf]
    %v1949 = vld [vmem:[#allocation10 + $0x34] sm:$0xf]
    %v1950 = vld [vmem:[#allocation10 + $0x38] sm:$0xf]
    %v1951 = vld [vmem:[#allocation10 + $0x3c] sm:$0xf]
    %v1952 = vld [vmem:[#allocation10 + $0x40] sm:$0xf]
    %v1953 = vld [vmem:[#allocation10 + $0x44] sm:$0xf]
    %v1954 = vld [vmem:[#allocation10 + $0x48] sm:$0xf]
    %v1955 = vld [vmem:[#allocation10 + $0x4c] sm:$0xf]
    %v1956 = vld [vmem:[#allocation10 + $0x50] sm:$0xf]
    %v1957 = vld [vmem:[#allocation10 + $0x54] sm:$0xf]
    %v1958 = vld [vmem:[#allocation10 + $0x58] sm:$0xf]
    %v1959 = vld [vmem:[#allocation10 + $0x5c] sm:$0xf]
    %v1960 = vld [vmem:[#allocation10 + $0x60] sm:$0xf]
    %v1961 = vld [vmem:[#allocation10 + $0x64] sm:$0xf]
    %v1962 = vld [vmem:[#allocation10 + $0x68] sm:$0xf]
    %v1963 = vld [vmem:[#allocation10 + $0x6c] sm:$0xf]
    %v1964 = vld [vmem:[#allocation10 + $0x70] sm:$0xf]
    %v1965 = vld [vmem:[#allocation10 + $0x74] sm:$0xf]
    %v1966 = vld [vmem:[#allocation10 + $0x78] sm:$0xf]
    %v1967 = vld [vmem:[#allocation10 + $0x7c] sm:$0xf]
    %v1968 = vld [vmem:[%s14] sm:$0x1]
    %v1970 = vlaneseq
    %v1971 = vshrl.u32 %v1970, 7
    %v1972 = vsub.s32 0, %v1971
    %v1973 = vrot.slane %v1968, %v1972
    %v2007 = vunpack.c.l.b16 %v1936
    %v2008 = vunpack.c.l.b16 %v1937
    %v2009 = vunpack.c.l.b16 %v1938
    %v2010 = vunpack.c.l.b16 %v1939
    %v2011 = vunpack.c.l.b16 %v1940
    %v2012 = vunpack.c.l.b16 %v1941
    %v2013 = vunpack.c.l.b16 %v1942
    %v2014 = vunpack.c.l.b16 %v1943
    %v2015 = vunpack.c.l.b16 %v1944
    %v2016 = vunpack.c.l.b16 %v1945
    %v2017 = vunpack.c.l.b16 %v1946
    %v2018 = vunpack.c.l.b16 %v1947
    %v2019 = vunpack.c.l.b16 %v1948
    %v2020 = vunpack.c.l.b16 %v1949
    %v2021 = vunpack.c.l.b16 %v1950
    %v2022 = vunpack.c.l.b16 %v1951
    %v2023 = vunpack.c.l.b16 %v1952
    %v2024 = vunpack.c.l.b16 %v1953
    %v2025 = vunpack.c.l.b16 %v1954
    %v2026 = vunpack.c.l.b16 %v1955
    %v2027 = vunpack.c.l.b16 %v1956
    %v2028 = vunpack.c.l.b16 %v1957
    %v2029 = vunpack.c.l.b16 %v1958
    %v2030 = vunpack.c.l.b16 %v1959
    %v2031 = vunpack.c.l.b16 %v1960
    %v2032 = vunpack.c.l.b16 %v1961
    %v2033 = vunpack.c.l.b16 %v1962
    %v2034 = vunpack.c.l.b16 %v1963
    %v2035 = vunpack.c.l.b16 %v1964
    %v2036 = vunpack.c.l.b16 %v1965
    %v2037 = vunpack.c.l.b16 %v1966
    %v2038 = vunpack.c.l.b16 %v1967
    %v2039 = vpack.c.b16 %v2008, %v2007
    %v2040 = vpack.c.b16 %v2010, %v2009
    %v2041 = vpack.c.b16 %v2012, %v2011
    %v2042 = vpack.c.b16 %v2014, %v2013
    %v2043 = vpack.c.b16 %v2016, %v2015
    %v2044 = vpack.c.b16 %v2018, %v2017
    %v2045 = vpack.c.b16 %v2020, %v2019
    %v2046 = vpack.c.b16 %v2022, %v2021
    %v2047 = vpack.c.b16 %v2024, %v2023
    %v2048 = vpack.c.b16 %v2026, %v2025
    %v2049 = vpack.c.b16 %v2028, %v2027
    %v2050 = vpack.c.b16 %v2030, %v2029
    %v2051 = vpack.c.b16 %v2032, %v2031
    %v2052 = vpack.c.b16 %v2034, %v2033
    %v2053 = vpack.c.b16 %v2036, %v2035
    %v2054 = vpack.c.b16 %v2038, %v2037
    %2071 = vmatprep.subr.bf16.mxu0 0
    %2072 = vmatpush1.bf16.msra.mxu0 %v2039
    %2073 = vmatprep.subr.bf16.mxu0 0
    %2074 = vmatpush1.bf16.msra.mxu0 %v2040
    %2075 = vmatprep.subr.bf16.mxu0 0
    %2076 = vmatpush1.bf16.msra.mxu0 %v2041
    %2077 = vmatprep.subr.bf16.mxu0 0
    %2078 = vmatpush1.bf16.msra.mxu0 %v2042
    %2079 = vmatprep.subr.bf16.mxu0 0
    %2080 = vmatpush1.bf16.msra.mxu0 %v2043
    %2081 = vmatprep.subr.bf16.mxu0 0
    %2082 = vmatpush1.bf16.msra.mxu0 %v2044
    %2083 = vmatprep.subr.bf16.mxu0 0
    %2084 = vmatpush1.bf16.msra.mxu0 %v2045
    %2085 = vmatprep.subr.bf16.mxu0 0
    %2086 = vmatpush1.bf16.msra.mxu0 %v2046
    %2087 = vmatprep.subr.bf16.mxu0 0
    %2088 = vmatpush1.bf16.msra.mxu0 %v2047
    %2089 = vmatprep.subr.bf16.mxu0 0
    %2090 = vmatpush1.bf16.msra.mxu0 %v2048
    %2091 = vmatprep.subr.bf16.mxu0 0
    %2092 = vmatpush1.bf16.msra.mxu0 %v2049
    %2093 = vmatprep.subr.bf16.mxu0 0
    %2094 = vmatpush1.bf16.msra.mxu0 %v2050
    %2095 = vmatprep.subr.bf16.mxu0 0
    %2096 = vmatpush1.bf16.msra.mxu0 %v2051
    %2097 = vmatprep.subr.bf16.mxu0 0
    %2098 = vmatpush1.bf16.msra.mxu0 %v2052
    %2099 = vmatprep.subr.bf16.mxu0 0
    %2100 = vmatpush1.bf16.msra.mxu0 %v2053
    %2101 = vmatprep.subr.bf16.mxu0 0
    %2102 = vmatpush1.bf16.msra.mxu0 %v2054
    %2103 = vmatprep.mubr.bf16.mxu0 %v1935
    %2104 = vmatmul.mubr.bf16.gmra.mrb[0].mxu0 %v1934
    %v2105 = vpop.f32.mrb[0].mxu0
    %v2106 = vadd.f32 %v1973, %v2105
    %v2107 = vpop.f32.mrb[0].mxu0
    %v2108 = vpop.f32.mrb[0].mxu0
    %v2109 = vpop.f32.mrb[0].mxu0
    %2110 = vdwg.mxu0
    %2111 = vst [vmem:[#allocation11] sm:$0xff] %v2106
    // Predicated region
    $region82: #{tpu_custom_call.1} parent=1 // pred_check
      _
    $region83: #{tpu_custom_call.1} parent=1 // pred_check_branch
      %2113 = sbr.rel (0) target = $region85
    $region84: #{tpu_custom_call.1} parent=1 // pred_region
      %s2115 = ssub.s32 128, 128
      %2116 = vsyncadd [#allocation4], %s2115
      %s2118 = sshll.u32 [#allocation11], 4
      %s2119 = int_to_ptr.vmem [resolvable:$true] %s2118
      %2121 = dma.vmem_to_hbm [thread:$0]  %s2119, 128, %s15, [#allocation4]
    $region85: #{tpu_custom_call.1} parent=1 // pred_fallthru
      _
    // Predicated region
    $region86: #{tpu_custom_call.1} parent=1 // pred_check
      _
    $region87: #{tpu_custom_call.1} parent=1 // pred_check_branch
      %2123 = sbr.rel (0) target = $region89
    $region88: #{tpu_custom_call.1} parent=1 // pred_region
      %2124 = dma.done [#allocation4], 128
    $region89: #{tpu_custom_call.1} parent=1 // pred_fallthru
      _
    %2125 = vsyncpa [#allocation3], 1
    %2126 = vsyncpa [#allocation6], 1
    %2127 = vsyncpa [#allocation9], 1
    %2128 = vsyncpa [#allocation4], 1

</llo_original>
